<compile_context>
chip_gen: v6e
topology: v6e:2x2x1
jax: 0.10.0
libtpu: 0.0.40
codegen_flags: <defaults>
</compile_context>

<pallas_src>
import jax
import jax.numpy as jnp
from jax.experimental import pallas as pl
from jax.experimental.pallas import tpu as pltpu


def _round_up(x, m):
    return ((x + m - 1) // m) * m


# ----------------------------------------------------------------------------
# Pallas kernel: whole TimeSpaceNet forward for one batch tile of TB columns
# (feature-major: arrays are (features, TB) with batch on the lane axis)
# ----------------------------------------------------------------------------
def timespace_kernel(x_ref, w1_ref, w2_ref, wf1_ref, wf2_ref, b_ref, o_ref):
    f32 = jnp.float32
    x = x_ref[...]                                   # (4, TB) rows [x, y, z, f]

    # Unpack the (96, 4) bias slab (static slices -> free).  Column layout must
    # stay in sync with pack_params below.
    b1 = b_ref[:, 0:1]                               # layer-1 bias  [b1t ; b1s]   (96, 1)
    b2 = b_ref[0:33, 1:2]                            # layer-2 bias  [b2t ; b2s]   (33, 1)
    bf1 = b_ref[0:64, 2:3]                           # fusion fc1 bias             (64, 1)
    bf2 = b_ref[0:2, 3:4]                            # fusion fc2 bias             (2, 1)

    # Layer 1: TimeNet.fc1 (+)  SpaceNet.fc1 as one block-diagonal matmul.
    # The /1e8 and *1e7 input scalings are already folded into w1.
    h_all = jnp.maximum(
        jnp.dot(w1_ref[...], x, preferred_element_type=f32) + b1, 0.0)        # (96, TB)

    # Layer 2: TimeNet.fc2 (+) SpaceNet.fc2 -> stacked [time_feat ; space_feat].
    # This stacking IS FusionNet's torch.cat((time, space), dim=1), so no concat is needed.
    ts = jnp.maximum(
        jnp.dot(w2_ref[...], h_all, preferred_element_type=f32) + b2, 0.0)    # (33, TB)

    # FusionNet: fc1 + ReLU, fc2 (no final activation).
    fused = jnp.maximum(
        jnp.dot(wf1_ref[...], ts, preferred_element_type=f32) + bf1, 0.0)     # (64, TB)
    o_ref[...] = jnp.dot(wf2_ref[...], fused, preferred_element_type=f32) + bf2  # (2, TB)


# ----------------------------------------------------------------------------
# Parameters (deterministic, PyTorch-Linear-style init; stored (out, in) like
# torch so the feature-major math is W @ x + b) and kernel-side packing
# ----------------------------------------------------------------------------
def _linear_params(key, in_dim, out_dim):
    kw, kb = jax.random.split(key)
    bound = 1.0 / (in_dim ** 0.5)
    w = jax.random.uniform(kw, (out_dim, in_dim), jnp.float32, -bound, bound)
    b = jax.random.uniform(kb, (out_dim,), jnp.float32, -bound, bound)
    return w, b


def init_params(key):
    keys = jax.random.split(key, 6)
    p = {}
    p["w1t"], p["b1t"] = _linear_params(keys[0], 1, 32)    # TimeNet fc1   (32, 1)
    p["w2t"], p["b2t"] = _linear_params(keys[1], 32, 1)    # TimeNet fc2   (1, 32)
    p["w1s"], p["b1s"] = _linear_params(keys[2], 3, 64)    # SpaceNet fc1  (64, 3)
    p["w2s"], p["b2s"] = _linear_params(keys[3], 64, 32)   # SpaceNet fc2  (32, 64)
    p["wf1"], p["bf1"] = _linear_params(keys[4], 33, 64)   # FusionNet fc1 (64, 33)
    p["wf2"], p["bf2"] = _linear_params(keys[5], 64, 2)    # FusionNet fc2 (2, 64)
    return p


def pack_params(p):
    """Block-diagonal weight packing (+ input-scale folding) and a single bias slab."""
    f32 = jnp.float32

    # Layer 1 block-diagonal (96, 4); input rows are [x, y, z, f].
    w1 = jnp.zeros((96, 4), f32)
    w1 = w1.at[0:32, 3:4].set(p["w1t"].astype(f32) / 1.0e8)    # TimeNet fc1, /1e8 folded
    w1 = w1.at[32:96, 0:3].set(p["w1s"].astype(f32) * 1.0e7)   # SpaceNet fc1, *1e7 folded

    # Layer 2 block-diagonal (33, 96): row 0 = time_feat, rows 1:33 = space_feat.
    w2 = jnp.zeros((33, 96), f32)
    w2 = w2.at[0:1, 0:32].set(p["w2t"].astype(f32))
    w2 = w2.at[1:33, 32:96].set(p["w2s"].astype(f32))

    wf1 = p["wf1"].astype(f32)                                 # (64, 33): expects [time | space]
    wf2 = p["wf2"].astype(f32)                                 # (2, 64)

    # Bias slab (96, 4): col0 = layer-1, col1 = layer-2, col2 = fusion fc1, col3 = fusion fc2.
    bias = jnp.zeros((96, 4), f32)
    bias = bias.at[0:96, 0].set(jnp.concatenate([p["b1t"], p["b1s"]]).astype(f32))
    bias = bias.at[0:33, 1].set(jnp.concatenate([p["b2t"], p["b2s"]]).astype(f32))
    bias = bias.at[0:64, 2].set(p["bf1"].astype(f32))
    bias = bias.at[0:2, 3].set(p["bf2"].astype(f32))

    return w1, w2, wf1, wf2, bias


# ----------------------------------------------------------------------------
# Wrapper
# ----------------------------------------------------------------------------
def timespace_net(input_tensor, params, *, tb=2048):
    """input_tensor: (B, 4) columns ['x','y','z','f'] -> (B, 2) ['phi_r','phi_i']."""
    B = input_tensor.shape[0]
    x = input_tensor.astype(jnp.float32)

    lane = 128
    b_pad = _round_up(B, lane)
    # Batch tile on the lane axis: multiple of 128, no bigger than the (padded) batch.
    tb = max(lane, min(_round_up(tb, lane), b_pad))
    # Keep >= 2 grid steps when the batch allows it, so v7x's two TensorCores both get
    # work via the "parallel" axis (no effect on single-TC v5e/v6e).
    if b_pad >= 2 * lane and b_pad // tb < 2:
        tb = max(lane, _round_up(pl.cdiv(B, 2), lane))
    Bp = _round_up(B, tb)
    if Bp != B:
        x = jnp.pad(x, ((0, Bp - B), (0, 0)))

    x_t = x.T                                         # (4, Bp): batch on the lane axis

    w1, w2, wf1, wf2, bias = pack_params(params)

    def const(shape):                                 # weights: fetched once, VMEM-resident
        return pl.BlockSpec(shape, lambda i: (0, 0))

    grid_spec = pltpu.PrefetchScalarGridSpec(
        num_scalar_prefetch=0,
        grid=(Bp // tb,),
        in_specs=[
            pl.BlockSpec((4, tb), lambda i: (0, i)),  # batch-tiled, feature-major input
            const((96, 4)),                           # W1  (block-diag layer 1, scales folded)
            const((33, 96)),                          # W2  (block-diag layer 2)
            const((64, 33)),                          # Wf1
            const((2, 64)),                           # Wf2
            const((96, 4)),                           # bias slab
        ],
        out_specs=pl.BlockSpec((2, tb), lambda i: (0, i)),
    )

    flops = 2 * Bp * (96 * 4 + 33 * 96 + 64 * 33 + 2 * 64)
    param_bytes = 4 * (96 * 4 + 33 * 96 + 64 * 33 + 2 * 64 + 96 * 4)
    cost = pl.CostEstimate(flops=flops, transcendentals=0,
                           bytes_accessed=Bp * 4 * (4 + 2) + param_bytes)

    out_t = pl.pallas_call(
        timespace_kernel,
        out_shape=jax.ShapeDtypeStruct((2, Bp), jnp.float32),
        grid_spec=grid_spec,
        compiler_params=pltpu.CompilerParams(
            dimension_semantics=("parallel",)),       # megacore split on v7x
        cost_estimate=cost,
    )(x_t, w1, w2, wf1, wf2, bias)

    return out_t.T[:B]                                # back to (B, 2)


# ----------------------------------------------------------------------------
# Pure-JAX reference (faithful to the PyTorch module, batch-major)
# ----------------------------------------------------------------------------
def timespace_ref(x, p):
    t = x[:, 3:4] / 1.0e8                             # extract(['f']) / 1e8
    s = x[:, 0:3] * 1.0e7                             # extract(['x','y','z']) * 1e7
    h_t = jnp.maximum(t @ p["w1t"].T + p["b1t"], 0.0)
    tf = jnp.maximum(h_t @ p["w2t"].T + p["b2t"], 0.0)
    h_s = jnp.maximum(s @ p["w1s"].T + p["b1s"], 0.0)
    sf = jnp.maximum(h_s @ p["w2s"].T + p["b2s"], 0.0)
    c = jnp.concatenate([tf, sf], axis=1)
    f1 = jnp.maximum(c @ p["wf1"].T + p["bf1"], 0.0)
    return f1 @ p["wf2"].T + p["bf2"]


if __name__ == "__main__":
    key = jax.random.PRNGKey(0)
    k_param, k_xyz, k_f = jax.random.split(key, 3)

    params = init_params(k_param)

    B = 1000   # not a multiple of the tile -> exercises padding and the >=2-grid-step path
    # columns ['x','y','z','f'] in the regimes the module expects
    xyz = jax.random.uniform(k_xyz, (B, 3), jnp.float32, -1.0e-7, 1.0e-7)
    f = jax.random.uniform(k_f, (B, 1), jnp.float32, 1.0e7, 1.0e8)
    x = jnp.concatenate([xyz, f], axis=1)             # (B, 4)

    out = jax.block_until_ready(timespace_net(x, params))

    ref = timespace_ref(x, params)
    assert out.shape == (B, 2)
    # rtol slightly relaxed vs. 1e-4: the /1e8, *1e7 scales are folded into the layer-1
    # weights (one extra rounding per weight vs. the reference's scale-then-matmul order).
    assert jnp.allclose(out, ref, atol=1e-4, rtol=1e-3), "mismatch vs reference"

    print("KERNEL_OK")
</pallas_src>

<mosaic_0001>
module attributes {stable_mosaic.version = 11 : i64} {
  func.func @timespace_kernel(%arg0: i32, %arg1: memref<4x512xf32, #tpu.memory_space<vmem>>, %arg2: memref<96x4xf32, #tpu.memory_space<vmem>>, %arg3: memref<33x96xf32, #tpu.memory_space<vmem>>, %arg4: memref<64x33xf32, #tpu.memory_space<vmem>>, %arg5: memref<2x64xf32, #tpu.memory_space<vmem>>, %arg6: memref<96x4xf32, #tpu.memory_space<vmem>>, %arg7: memref<2x512xf32, #tpu.memory_space<vmem>>) attributes {dimension_semantics = [#tpu.dimension_semantics<parallel>], iteration_bounds = array<i64: 2>, scalar_prefetch = 0 : i64, scratch_operands = 0 : i64, tpu.core_type = #tpu.core_type<tc>, window_params = [{transform_indices = @transform_0, window_bounds = array<i64: 4, 512>}, {pipeline_mode = #tpu.pipeline_mode<synchronous>, transform_indices = @transform_1, window_bounds = array<i64: 96, 4>}, {pipeline_mode = #tpu.pipeline_mode<synchronous>, transform_indices = @transform_2, window_bounds = array<i64: 33, 96>}, {pipeline_mode = #tpu.pipeline_mode<synchronous>, transform_indices = @transform_3, window_bounds = array<i64: 64, 33>}, {pipeline_mode = #tpu.pipeline_mode<synchronous>, transform_indices = @transform_4, window_bounds = array<i64: 2, 64>}, {pipeline_mode = #tpu.pipeline_mode<synchronous>, transform_indices = @transform_5, window_bounds = array<i64: 96, 4>}, {transform_indices = @transform_6, window_bounds = array<i64: 2, 512>}]} {
    %c0 = arith.constant 0 : index
    %c0_0 = arith.constant 0 : index
    %0 = vector.load %arg1[%c0, %c0_0] : memref<4x512xf32, #tpu.memory_space<vmem>>, vector<4x512xf32>
    %c0_1 = arith.constant 0 : index
    %c0_2 = arith.constant 0 : index
    %1 = vector.load %arg6[%c0_1, %c0_2] : memref<96x4xf32, #tpu.memory_space<vmem>>, vector<96x1xf32>
    %c0_3 = arith.constant 0 : index
    %c1 = arith.constant 1 : index
    %2 = vector.load %arg6[%c0_3, %c1] : memref<96x4xf32, #tpu.memory_space<vmem>>, vector<33x1xf32>
    %c0_4 = arith.constant 0 : index
    %c2 = arith.constant 2 : index
    %3 = vector.load %arg6[%c0_4, %c2] : memref<96x4xf32, #tpu.memory_space<vmem>>, vector<64x1xf32>
    %c0_5 = arith.constant 0 : index
    %c3 = arith.constant 3 : index
    %4 = vector.load %arg6[%c0_5, %c3] : memref<96x4xf32, #tpu.memory_space<vmem>>, vector<2x1xf32>
    %c0_6 = arith.constant 0 : index
    %c0_7 = arith.constant 0 : index
    %5 = vector.load %arg2[%c0_6, %c0_7] : memref<96x4xf32, #tpu.memory_space<vmem>>, vector<96x4xf32>
    %cst = arith.constant dense<0.000000e+00> : vector<96x512xf32>
    %6 = tpu.matmul %5, %0, %cst {dimension_numbers = #tpu.dot_dimension_numbers<[1], [0], [0], [1], [0, 0, 1, 1], [], []>} : vector<96x4xf32>, vector<4x512xf32>, vector<96x512xf32> -> vector<96x512xf32>
    %7 = vector.broadcast %1 : vector<96x1xf32> to vector<96x512xf32>
    %8 = arith.addf %6, %7 : vector<96x512xf32>
    %cst_8 = arith.constant 0.000000e+00 : f32
    %9 = vector.broadcast %cst_8 : f32 to vector<96x512xf32>
    %10 = arith.maximumf %8, %9 : vector<96x512xf32>
    %c0_9 = arith.constant 0 : index
    %c0_10 = arith.constant 0 : index
    %11 = vector.load %arg3[%c0_9, %c0_10] : memref<33x96xf32, #tpu.memory_space<vmem>>, vector<33x96xf32>
    %cst_11 = arith.constant dense<0.000000e+00> : vector<33x512xf32>
    %12 = tpu.matmul %11, %10, %cst_11 {dimension_numbers = #tpu.dot_dimension_numbers<[1], [0], [0], [1], [0, 0, 1, 1], [], []>} : vector<33x96xf32>, vector<96x512xf32>, vector<33x512xf32> -> vector<33x512xf32>
    %13 = vector.broadcast %2 : vector<33x1xf32> to vector<33x512xf32>
    %14 = arith.addf %12, %13 : vector<33x512xf32>
    %cst_12 = arith.constant 0.000000e+00 : f32
    %15 = vector.broadcast %cst_12 : f32 to vector<33x512xf32>
    %16 = arith.maximumf %14, %15 : vector<33x512xf32>
    %c0_13 = arith.constant 0 : index
    %c0_14 = arith.constant 0 : index
    %17 = vector.load %arg4[%c0_13, %c0_14] : memref<64x33xf32, #tpu.memory_space<vmem>>, vector<64x33xf32>
    %cst_15 = arith.constant dense<0.000000e+00> : vector<64x512xf32>
    %18 = tpu.matmul %17, %16, %cst_15 {dimension_numbers = #tpu.dot_dimension_numbers<[1], [0], [0], [1], [0, 0, 1, 1], [], []>} : vector<64x33xf32>, vector<33x512xf32>, vector<64x512xf32> -> vector<64x512xf32>
    %19 = vector.broadcast %3 : vector<64x1xf32> to vector<64x512xf32>
    %20 = arith.addf %18, %19 : vector<64x512xf32>
    %cst_16 = arith.constant 0.000000e+00 : f32
    %21 = vector.broadcast %cst_16 : f32 to vector<64x512xf32>
    %22 = arith.maximumf %20, %21 : vector<64x512xf32>
    %c0_17 = arith.constant 0 : index
    %c0_18 = arith.constant 0 : index
    %23 = vector.load %arg5[%c0_17, %c0_18] : memref<2x64xf32, #tpu.memory_space<vmem>>, vector<2x64xf32>
    %cst_19 = arith.constant dense<0.000000e+00> : vector<2x512xf32>
    %24 = tpu.matmul %23, %22, %cst_19 {dimension_numbers = #tpu.dot_dimension_numbers<[1], [0], [0], [1], [0, 0, 1, 1], [], []>} : vector<2x64xf32>, vector<64x512xf32>, vector<2x512xf32> -> vector<2x512xf32>
    %25 = vector.broadcast %4 : vector<2x1xf32> to vector<2x512xf32>
    %26 = arith.addf %24, %25 : vector<2x512xf32>
    %c0_20 = arith.constant 0 : index
    %c0_21 = arith.constant 0 : index
    %27 = vector.load %arg7[%c0_20, %c0_21] : memref<2x512xf32, #tpu.memory_space<vmem>>, vector<2x512xf32>
    tpu.vector_store %arg7[%c0_20, %c0_21], %26 {strides = array<i32>} : memref<2x512xf32, #tpu.memory_space<vmem>>, vector<2x512xf32>,
    return
  }
  func.func @transform_0(%arg0: i32) -> (i32, i32) {
    %c0_i32 = arith.constant 0 : i32
    %c0_i32_0 = arith.constant 0 : i32
    return %c0_i32, %arg0 : i32, i32
  }
  func.func @transform_1(%arg0: i32) -> (i32, i32) {
    %c0_i32 = arith.constant 0 : i32
    %c0_i32_0 = arith.constant 0 : i32
    %c0_i32_1 = arith.constant 0 : i32
    return %c0_i32, %c0_i32_0 : i32, i32
  }
  func.func @transform_2(%arg0: i32) -> (i32, i32) {
    %c0_i32 = arith.constant 0 : i32
    %c0_i32_0 = arith.constant 0 : i32
    %c0_i32_1 = arith.constant 0 : i32
    return %c0_i32, %c0_i32_0 : i32, i32
  }
  func.func @transform_3(%arg0: i32) -> (i32, i32) {
    %c0_i32 = arith.constant 0 : i32
    %c0_i32_0 = arith.constant 0 : i32
    %c0_i32_1 = arith.constant 0 : i32
    return %c0_i32, %c0_i32_0 : i32, i32
  }
  func.func @transform_4(%arg0: i32) -> (i32, i32) {
    %c0_i32 = arith.constant 0 : i32
    %c0_i32_0 = arith.constant 0 : i32
    %c0_i32_1 = arith.constant 0 : i32
    return %c0_i32, %c0_i32_0 : i32, i32
  }
  func.func @transform_5(%arg0: i32) -> (i32, i32) {
    %c0_i32 = arith.constant 0 : i32
    %c0_i32_0 = arith.constant 0 : i32
    %c0_i32_1 = arith.constant 0 : i32
    return %c0_i32, %c0_i32_0 : i32, i32
  }
  func.func @transform_6(%arg0: i32) -> (i32, i32) {
    %c0_i32 = arith.constant 0 : i32
    %c0_i32_0 = arith.constant 0 : i32
    return %c0_i32, %arg0 : i32, i32
  }
}

</mosaic_0001>

<llo_original>
// kernel: tpu_custom_call.1
$region0: #{tpu_custom_call.1}
  #allocation0 [shape = 'u32[]', space=smem, size = 0x4, offset = 0x4, fixed_abs, tag = 'smem constant byte address 0x4 - core index']
  #allocation1 [shape = 'u32[144,128]{1,0:T(1,128)}', space=vmem, size = 0x12000, scoped, tag = 'internal scratch']
  %s0 = inlined_call_operand.vmem [shape: f32[4,1024], index: 0, kind: input, shape index: {}]
  %s1 = inlined_call_operand.vmem [shape: f32[96,4], index: 1, kind: input, shape index: {}]
  %s2 = inlined_call_operand.vmem [shape: f32[33,96], index: 2, kind: input, shape index: {}]
  %s3 = inlined_call_operand.vmem [shape: f32[64,33], index: 3, kind: input, shape index: {}]
  %s4 = inlined_call_operand.vmem [shape: f32[2,64], index: 4, kind: input, shape index: {}]
  %s5 = inlined_call_operand.vmem [shape: f32[96,4], index: 5, kind: input, shape index: {}]
  %s6 = inlined_call_operand.hbm [shape: f32[2,1024], index: 6, kind: output, shape index: {}]
  %s7 = sld [smem:[#allocation0]]
  $region57: #{tpu_custom_call.1} parent=0
    _
  %s9 = ssub.s32 1, %s7
  %s10 = scalar_select 0, %s9, %s7
  $region1: #{tpu_custom_call.1} parent=0
    #allocation2 [shape = 'u8[8192]{0}', space=vmem, size = 0x2000, scoped, tag = 'output window, operand 0']
    #allocation3 [shape = 's32[2]{0}', space=sflag, size = 0x8, scoped, tag = 'scoped memory for tpu_custom_call.1']
    %11 = vsyncpa [#allocation3], 0
    %s12 = scalar_lea.sflag [#allocation3], 1
    %13 = vsyncpa %s12, 0
    loop: start=0, step=1, limit=4
    $region2: #{tpu_custom_call.1} parent=1 // loop_pre_header
      _
    $region3: #{tpu_custom_call.1} parent=1 // loop_header
      %s15 = sphi 0, %s19
      %p16 = scmp.ge.s32.totalorder %s15, 4
      %s25 = sphi 0, %s27
      %s28 = sphi 0, %s25
      %s29 = sphi 0, %s28
      %s45 = sphi 0, %s29
      %s49 = sphi 0, %s49
      %s51 = sphi 0, %s49
      %s52 = sphi 0, %s51
      %s66 = sphi 0, %s52
      %s70 = sphi 0, %s70
      %s72 = sphi 0, %s70
      %s73 = sphi 0, %s72
      %s87 = sphi 0, %s73
      %s91 = sphi 0, %s91
      %s93 = sphi 0, %s91
      %s94 = sphi 0, %s93
      %s108 = sphi 0, %s94
      %s112 = sphi 0, %s112
      %s114 = sphi 0, %s112
      %s115 = sphi 0, %s114
      %s129 = sphi 0, %s115
      %s133 = sphi 0, %s133
      %s135 = sphi 0, %s133
      %s136 = sphi 0, %s135
      %s150 = sphi 0, %s136
      %s156 = sphi 0, %s158
      %s159 = sphi 0, %s156
      %s160 = sphi 0, %s159
      %s176 = sphi 0, %s160
    $region4: #{tpu_custom_call.1} parent=1 // loop_header_branch
      %18 = sbr.rel (%p16) target = $region8
    $region5: #{tpu_custom_call.1} parent=1 // loop_body
      %s20 = ssub.s32 %s15, 1
      %s21 = ssub.s32 %s15, 2
      %s22 = sadd.s32 %s15, 1
      %s23 = ssub.s32 %s15, %s22
      %p24 = scmp.eq.s32.totalorder %s23, 0
      %s26 = sadd.s32 %s25, 1
      %s27 = scalar_select %p24, %s25, %s26
      %p30 = pneg %p24
      %p31 = scmp.eq.s32.totalorder %s15, 1
      %p32 = por %p30, %p31
      %p33 = scmp.ne.s32.totalorder %s25, %s28
      %p34 = scmp.eq.s32.totalorder %s15, 0
      %p35 = por %p33, %p34
      %p36 = scmp.ne.s32.totalorder %s25, %s28
      %p37 = scmp.eq.s32.totalorder %s20, 1
      %p38 = por %p36, %p37
      %p39 = scmp.ne.s32.totalorder %s28, %s29
      %p40 = scmp.eq.s32.totalorder %s20, 0
      %p41 = por %p39, %p40
      %p42 = scmp.ne.s32.totalorder %s28, %s29
      %p43 = scmp.eq.s32.totalorder %s21, 1
      %p44 = por %p42, %p43
      %p46 = scmp.ne.s32.totalorder %s29, %s45
      %p47 = scmp.eq.s32.totalorder %s21, 0
      %p48 = por %p46, %p47
      %s50 = sadd.s32 %s49, 1
      %p53 = scmp.eq.s32.totalorder %s15, 1
      %p54 = scmp.ne.s32.totalorder %s49, %s51
      %p55 = scmp.eq.s32.totalorder %s15, 0
      %p56 = por %p54, %p55
      %p57 = scmp.ne.s32.totalorder %s49, %s51
      %p58 = scmp.eq.s32.totalorder %s20, 1
      %p59 = por %p57, %p58
      %p60 = scmp.ne.s32.totalorder %s51, %s52
      %p61 = scmp.eq.s32.totalorder %s20, 0
      %p62 = por %p60, %p61
      %p63 = scmp.ne.s32.totalorder %s51, %s52
      %p64 = scmp.eq.s32.totalorder %s21, 1
      %p65 = por %p63, %p64
      %p67 = scmp.ne.s32.totalorder %s52, %s66
      %p68 = scmp.eq.s32.totalorder %s21, 0
      %p69 = por %p67, %p68
      %s71 = sadd.s32 %s70, 1
      %p74 = scmp.eq.s32.totalorder %s15, 1
      %p75 = scmp.ne.s32.totalorder %s70, %s72
      %p76 = scmp.eq.s32.totalorder %s15, 0
      %p77 = por %p75, %p76
      %p78 = scmp.ne.s32.totalorder %s70, %s72
      %p79 = scmp.eq.s32.totalorder %s20, 1
      %p80 = por %p78, %p79
      %p81 = scmp.ne.s32.totalorder %s72, %s73
      %p82 = scmp.eq.s32.totalorder %s20, 0
      %p83 = por %p81, %p82
      %p84 = scmp.ne.s32.totalorder %s72, %s73
      %p85 = scmp.eq.s32.totalorder %s21, 1
      %p86 = por %p84, %p85
      %p88 = scmp.ne.s32.totalorder %s73, %s87
      %p89 = scmp.eq.s32.totalorder %s21, 0
      %p90 = por %p88, %p89
      %s92 = sadd.s32 %s91, 1
      %p95 = scmp.eq.s32.totalorder %s15, 1
      %p96 = scmp.ne.s32.totalorder %s91, %s93
      %p97 = scmp.eq.s32.totalorder %s15, 0
      %p98 = por %p96, %p97
      %p99 = scmp.ne.s32.totalorder %s91, %s93
      %p100 = scmp.eq.s32.totalorder %s20, 1
      %p101 = por %p99, %p100
      %p102 = scmp.ne.s32.totalorder %s93, %s94
      %p103 = scmp.eq.s32.totalorder %s20, 0
      %p104 = por %p102, %p103
      %p105 = scmp.ne.s32.totalorder %s93, %s94
      %p106 = scmp.eq.s32.totalorder %s21, 1
      %p107 = por %p105, %p106
      %p109 = scmp.ne.s32.totalorder %s94, %s108
      %p110 = scmp.eq.s32.totalorder %s21, 0
      %p111 = por %p109, %p110
      %s113 = sadd.s32 %s112, 1
      %p116 = scmp.eq.s32.totalorder %s15, 1
      %p117 = scmp.ne.s32.totalorder %s112, %s114
      %p118 = scmp.eq.s32.totalorder %s15, 0
      %p119 = por %p117, %p118
      %p120 = scmp.ne.s32.totalorder %s112, %s114
      %p121 = scmp.eq.s32.totalorder %s20, 1
      %p122 = por %p120, %p121
      %p123 = scmp.ne.s32.totalorder %s114, %s115
      %p124 = scmp.eq.s32.totalorder %s20, 0
      %p125 = por %p123, %p124
      %p126 = scmp.ne.s32.totalorder %s114, %s115
      %p127 = scmp.eq.s32.totalorder %s21, 1
      %p128 = por %p126, %p127
      %p130 = scmp.ne.s32.totalorder %s115, %s129
      %p131 = scmp.eq.s32.totalorder %s21, 0
      %p132 = por %p130, %p131
      %s134 = sadd.s32 %s133, 1
      %p137 = scmp.eq.s32.totalorder %s15, 1
      %p138 = scmp.ne.s32.totalorder %s133, %s135
      %p139 = scmp.eq.s32.totalorder %s15, 0
      %p140 = por %p138, %p139
      %p141 = scmp.ne.s32.totalorder %s133, %s135
      %p142 = scmp.eq.s32.totalorder %s20, 1
      %p143 = por %p141, %p142
      %p144 = scmp.ne.s32.totalorder %s135, %s136
      %p145 = scmp.eq.s32.totalorder %s20, 0
      %p146 = por %p144, %p145
      %p147 = scmp.ne.s32.totalorder %s135, %s136
      %p148 = scmp.eq.s32.totalorder %s21, 1
      %p149 = por %p147, %p148
      %p151 = scmp.ne.s32.totalorder %s136, %s150
      %p152 = scmp.eq.s32.totalorder %s21, 0
      %p153 = por %p151, %p152
      %s154 = ssub.s32 %s15, %s22
      %p155 = scmp.eq.s32.totalorder %s154, 0
      %s157 = sadd.s32 %s156, 1
      %s158 = scalar_select %p155, %s156, %s157
      %p161 = pneg %p155
      %p162 = scmp.eq.s32.totalorder %s15, 1
      %p163 = por %p161, %p162
      %p164 = scmp.ne.s32.totalorder %s156, %s159
      %p165 = scmp.eq.s32.totalorder %s15, 0
      %p166 = por %p164, %p165
      %p167 = scmp.ne.s32.totalorder %s156, %s159
      %p168 = scmp.eq.s32.totalorder %s20, 1
      %p169 = por %p167, %p168
      %p170 = scmp.ne.s32.totalorder %s159, %s160
      %p171 = scmp.eq.s32.totalorder %s20, 0
      %p172 = por %p170, %p171
      %p173 = scmp.ne.s32.totalorder %s159, %s160
      %p174 = scmp.eq.s32.totalorder %s21, 1
      %p175 = por %p173, %p174
      %p177 = scmp.ne.s32.totalorder %s160, %s176
      %p178 = scmp.eq.s32.totalorder %s21, 0
      %p179 = por %p177, %p178
      %p180 = scmp.le.s32.totalorder 1, %s15
      %p181 = scmp.lt.s32.totalorder %s15, 3
      %p182 = pnand %p180, %p181
      %p183 = pneg %p182
      // Predicated region
      $region9: #{tpu_custom_call.1} parent=5 // pred_check
        _
      $region10: #{tpu_custom_call.1} parent=5 // pred_check_branch
        %185 = sbr.rel (%p182) target = $region12
      $region11: #{tpu_custom_call.1} parent=5 // pred_region
        %s186 = ssub.s32 %s15, 1
        // Predicated region
        $region13: #{tpu_custom_call.1} parent=11 // pred_check
          %p187 = pneg %p62
        $region14: #{tpu_custom_call.1} parent=11 // pred_check_branch
          %189 = sbr.rel (%p187) target = $region16
        $region15: #{tpu_custom_call.1} parent=11 // pred_region
          _
        $region16: #{tpu_custom_call.1} parent=11 // pred_fallthru
          _
        // Predicated region
        $region17: #{tpu_custom_call.1} parent=11 // pred_check
          %p190 = pneg %p83
        $region18: #{tpu_custom_call.1} parent=11 // pred_check_branch
          %192 = sbr.rel (%p190) target = $region20
        $region19: #{tpu_custom_call.1} parent=11 // pred_region
          _
        $region20: #{tpu_custom_call.1} parent=11 // pred_fallthru
          _
        // Predicated region
        $region21: #{tpu_custom_call.1} parent=11 // pred_check
          %p193 = pneg %p104
        $region22: #{tpu_custom_call.1} parent=11 // pred_check_branch
          %195 = sbr.rel (%p193) target = $region24
        $region23: #{tpu_custom_call.1} parent=11 // pred_region
          _
        $region24: #{tpu_custom_call.1} parent=11 // pred_fallthru
          _
        // Predicated region
        $region25: #{tpu_custom_call.1} parent=11 // pred_check
          %p196 = pneg %p125
        $region26: #{tpu_custom_call.1} parent=11 // pred_check_branch
          %198 = sbr.rel (%p196) target = $region28
        $region27: #{tpu_custom_call.1} parent=11 // pred_region
          _
        $region28: #{tpu_custom_call.1} parent=11 // pred_fallthru
          _
        // Predicated region
        $region29: #{tpu_custom_call.1} parent=11 // pred_check
          %p199 = pneg %p146
        $region30: #{tpu_custom_call.1} parent=11 // pred_check_branch
          %201 = sbr.rel (%p199) target = $region32
        $region31: #{tpu_custom_call.1} parent=11 // pred_region
          _
        $region32: #{tpu_custom_call.1} parent=11 // pred_fallthru
          _
      $region12: #{tpu_custom_call.1} parent=5 // pred_fallthru
        _
      %p202 = scmp.lt.s32.totalorder %s15, 2
      // Predicated region
      $region33: #{tpu_custom_call.1} parent=5 // pred_check
        %p203 = pneg %p202
      $region34: #{tpu_custom_call.1} parent=5 // pred_check_branch
        %205 = sbr.rel (%p203) target = $region36
      $region35: #{tpu_custom_call.1} parent=5 // pred_region
        // Predicated region
        $region37: #{tpu_custom_call.1} parent=35 // pred_check
          %p206 = pneg %p35
        $region38: #{tpu_custom_call.1} parent=35 // pred_check_branch
          %208 = sbr.rel (%p206) target = $region40
        $region39: #{tpu_custom_call.1} parent=35 // pred_region
          %s209 = smul.u32 4, %s15
          %p210 = scmp.lt.s32.totalorder %s209, 7
          %s211 = scalar_select %p210, %s209, 7
          %s212 = smul.addr %s211, 4
          %s213 = scalar_lea.vmem %s0, %s212
          %s214 = smul.u32 4, %s15
        $region40: #{tpu_custom_call.1} parent=35 // pred_fallthru
          _
      $region36: #{tpu_custom_call.1} parent=5 // pred_fallthru
        _
      %p215 = scmp.le.s32.totalorder 1, %s15
      %p216 = scmp.lt.s32.totalorder %s15, 3
      %p217 = pnand %p215, %p216
      %p218 = pneg %p217
      // Predicated region
      $region41: #{tpu_custom_call.1} parent=5 // pred_check
        _
      $region42: #{tpu_custom_call.1} parent=5 // pred_check_branch
        %220 = sbr.rel (%p217) target = $region44
      $region43: #{tpu_custom_call.1} parent=5 // pred_region
        %s221 = ssub.s32 %s15, 1
        %s222 = smul.u32 4, %s20
        %p223 = scmp.lt.s32.totalorder %s222, 7
        %s224 = scalar_select %p223, %s222, 7
        %s225 = smul.addr %s224, 4
        %s226 = scalar_lea.vmem %s0, %s225
        %p227 = pneg %p41
        %p228 = pneg %p38
        %p229 = pneg %p62
        %p230 = pneg %p59
        %p231 = pneg %p83
        %p232 = pneg %p80
        %p233 = pneg %p104
        %p234 = pneg %p101
        %p235 = pneg %p125
        %p236 = pneg %p122
        %p237 = pneg %p146
        %p238 = pneg %p143
        %p239 = pneg %p172
        %p240 = pneg %p169
        %s241 = sand.u32 %s159, 1
        %s242 = scalar_lea.sflag [#allocation3], %s241
        %s243 = sand.u32 %s159, 1
        %s244 = smul.addr %s243, 8
        %s245 = scalar_lea.vmem [#allocation2], %s244
        %s246 = smul.u32 4, %s20
        %p247 = scmp.lt.s32.totalorder %s246, 7
        %s248 = scalar_select %p247, %s246, 7
        %s249 = smul.addr %s248, 4
        %s250 = scalar_lea.vmem %s0, %s249
        %s251 = smul.u32 4, %s20
        %s252 = smul.u32 4, %s20
        %v253 = vld [vmem:[%s250] sm:$0xff]
        %v254 = vld [vmem:[%s250 + $0x8] sm:$0xff]
        %v255 = vld [vmem:[%s5] sm:$0xff]
        %v256 = vld [vmem:[%s5 + $0x8] sm:$0xff]
        %v257 = vld [vmem:[%s5 + $0x10] sm:$0xff]
        %v258 = vld [vmem:[%s5 + $0x18] sm:$0xff]
        %v259 = vld [vmem:[%s5 + $0x20] sm:$0xff]
        %v260 = vld [vmem:[%s5 + $0x28] sm:$0xff]
        %v261 = vld [vmem:[%s5 + $0x30] sm:$0xff]
        %v262 = vld [vmem:[%s5 + $0x38] sm:$0xff]
        %v263 = vld [vmem:[%s5 + $0x40] sm:$0xff]
        %v264 = vld [vmem:[%s5 + $0x48] sm:$0xff]
        %v265 = vld [vmem:[%s5 + $0x50] sm:$0xff]
        %v266 = vld [vmem:[%s5 + $0x58] sm:$0xff]
        %v267 = vld [vmem:[%s5 + $0x20] sm:$0x1]
        %v268 = vld [vmem:[%s5] sm:$0x3]
        %v269 = vld [vmem:[%s1] sm:$0xff]
        %v270 = vld [vmem:[%s1 + $0x8] sm:$0xff]
        %v271 = vld [vmem:[%s1 + $0x10] sm:$0xff]
        %v272 = vld [vmem:[%s1 + $0x18] sm:$0xff]
        %v273 = vld [vmem:[%s1 + $0x20] sm:$0xff]
        %v274 = vld [vmem:[%s1 + $0x28] sm:$0xff]
        %v275 = vld [vmem:[%s1 + $0x30] sm:$0xff]
        %v276 = vld [vmem:[%s1 + $0x38] sm:$0xff]
        %v277 = vld [vmem:[%s1 + $0x40] sm:$0xff]
        %v278 = vld [vmem:[%s1 + $0x48] sm:$0xff]
        %v279 = vld [vmem:[%s1 + $0x50] sm:$0xff]
        %v280 = vld [vmem:[%s1 + $0x58] sm:$0xff]
        %282 = vset.pattern.permute.xlu0 0
        %283 = vperm.xlu0 %282, %v255
        %v284 = vpop.permute.xlu0 %283
        %287 = vset.pattern.permute.xlu0 0
        %288 = vperm.xlu0 %287, %v256
        %v289 = vpop.permute.xlu0 %288
        %292 = vset.pattern.permute.xlu0 0
        %293 = vperm.xlu0 %292, %v257
        %v294 = vpop.permute.xlu0 %293
        %297 = vset.pattern.permute.xlu0 0
        %298 = vperm.xlu0 %297, %v258
        %v299 = vpop.permute.xlu0 %298
        %302 = vset.pattern.permute.xlu0 0
        %303 = vperm.xlu0 %302, %v259
        %v304 = vpop.permute.xlu0 %303
        %307 = vset.pattern.permute.xlu0 0
        %308 = vperm.xlu0 %307, %v260
        %v309 = vpop.permute.xlu0 %308
        %312 = vset.pattern.permute.xlu0 0
        %313 = vperm.xlu0 %312, %v261
        %v314 = vpop.permute.xlu0 %313
        %317 = vset.pattern.permute.xlu0 0
        %318 = vperm.xlu0 %317, %v262
        %v319 = vpop.permute.xlu0 %318
        %322 = vset.pattern.permute.xlu0 0
        %323 = vperm.xlu0 %322, %v263
        %v324 = vpop.permute.xlu0 %323
        %327 = vset.pattern.permute.xlu0 0
        %328 = vperm.xlu0 %327, %v264
        %v329 = vpop.permute.xlu0 %328
        %332 = vset.pattern.permute.xlu0 0
        %333 = vperm.xlu0 %332, %v265
        %v334 = vpop.permute.xlu0 %333
        %337 = vset.pattern.permute.xlu0 0
        %338 = vperm.xlu0 %337, %v266
        %v339 = vpop.permute.xlu0 %338
        %v343 = vcombine.high %v253, %v253
        %v344 = vcombine.high %v254, %v254
        %vm345 = vcmask 31744
        %v347 = vsel %vm345, %v269, 0
        %v350 = vsel %vm345, %v270, 0
        %v353 = vsel %vm345, %v271, 0
        %v356 = vsel %vm345, %v272, 0
        %v359 = vsel %vm345, %v273, 0
        %v362 = vsel %vm345, %v274, 0
        %v365 = vsel %vm345, %v275, 0
        %v368 = vsel %vm345, %v276, 0
        %v371 = vsel %vm345, %v277, 0
        %v374 = vsel %vm345, %v278, 0
        %v377 = vsel %vm345, %v279, 0
        %v380 = vsel %vm345, %v280, 0
        %vm382 = vcmask 1043456
        %v383 = vsel %vm382, %v253, 0
        %v385 = vsel %vm382, %v343, 0
        %v387 = vsel %vm382, %v254, 0
        %v389 = vsel %vm382, %v344, 0
        %391 = vmatprep.subr.mxu0 0.0
        %392 = vmatpush1.msra.mxu0 0.0
        %393 = vmatprep.subr.mxu0 0.0
        %394 = vmatpush1.msra.mxu0 0.0
        %395 = vmatprep.subr.mxu0 0.0
        %396 = vmatpush1.msra.mxu0 0.0
        %397 = vmatprep.subr.mxu0 0.0
        %398 = vmatpush1.msra.mxu0 0.0
        %399 = vmatprep.subr.mxu0 0.0
        %400 = vmatpush1.msra.mxu0 0.0
        %401 = vmatprep.subr.mxu0 0.0
        %402 = vmatpush1.msra.mxu0 0.0
        %403 = vmatprep.subr.mxu0 0.0
        %404 = vmatpush1.msra.mxu0 0.0
        %405 = vmatprep.subr.mxu0 0.0
        %406 = vmatpush1.msra.mxu0 0.0
        %407 = vmatprep.subr.mxu0 0.0
        %408 = vmatpush1.msra.mxu0 0.0
        %409 = vmatprep.subr.mxu0 0.0
        %410 = vmatpush1.msra.mxu0 0.0
        %411 = vmatprep.subr.mxu0 0.0
        %412 = vmatpush1.msra.mxu0 0.0
        %413 = vmatprep.subr.mxu0 0.0
        %414 = vmatpush1.msra.mxu0 0.0
        %415 = vmatprep.subr.mxu0 0.0
        %416 = vmatpush1.msra.mxu0 0.0
        %417 = vmatprep.subr.mxu0 0.0
        %418 = vmatpush1.msra.mxu0 0.0
        %419 = vmatprep.subr.mxu0 0.0
        %420 = vmatpush1.msra.mxu0 0.0
        %421 = vmatprep.subr.mxu0 %v385
        %422 = vmatpush1.msra.mxu0 %v383
        %423 = vmatprep.subr.mxu0 0.0
        %424 = vmatpush2.msra.mxu0 0.0
        %425 = vmatprep.subr.mxu0 0.0
        %426 = vmatpush2.msra.mxu0 0.0
        %427 = vmatprep.subr.mxu0 0.0
        %428 = vmatpush2.msra.mxu0 0.0
        %429 = vmatprep.subr.mxu0 0.0
        %430 = vmatpush2.msra.mxu0 0.0
        %431 = vmatprep.subr.mxu0 0.0
        %432 = vmatpush2.msra.mxu0 0.0
        %433 = vmatprep.subr.mxu0 0.0
        %434 = vmatpush2.msra.mxu0 0.0
        %435 = vmatprep.subr.mxu0 0.0
        %436 = vmatpush2.msra.mxu0 0.0
        %437 = vmatprep.subr.mxu0 0.0
        %438 = vmatpush2.msra.mxu0 0.0
        %439 = vmatprep.subr.mxu0 0.0
        %440 = vmatpush2.msra.mxu0 0.0
        %441 = vmatprep.subr.mxu0 0.0
        %442 = vmatpush2.msra.mxu0 0.0
        %443 = vmatprep.subr.mxu0 0.0
        %444 = vmatpush2.msra.mxu0 0.0
        %445 = vmatprep.subr.mxu0 0.0
        %446 = vmatpush2.msra.mxu0 0.0
        %447 = vmatprep.subr.mxu0 0.0
        %448 = vmatpush2.msra.mxu0 0.0
        %449 = vmatprep.subr.mxu0 0.0
        %450 = vmatpush2.msra.mxu0 0.0
        %451 = vmatprep.subr.mxu0 0.0
        %452 = vmatpush2.msra.mxu0 0.0
        %453 = vmatprep.subr.mxu0 0.0
        %454 = vmatpush2.msra.mxu0 0.0
        %455 = vmatprep.mubr.f32.mxu0 0.0
        %456 = vmatmul.mubr.f32.gmra.mxu0 %v347
        %v457 = vpop.f32.mrf.mxu0
        %v458 = vadd.f32 %v284, %v457
        %v459 = vpop.f32.mrf.mxu0
        %v460 = vadd.f32 %v284, %v459
        %461 = vmatprep.mubr.f32.mxu0 0.0
        %462 = vmatmul.mubr.f32.gmra.mxu0 %v350
        %v463 = vpop.f32.mrf.mxu0
        %v464 = vadd.f32 %v289, %v463
        %v465 = vpop.f32.mrf.mxu0
        %v466 = vadd.f32 %v289, %v465
        %467 = vmatprep.mubr.f32.mxu0 0.0
        %468 = vmatmul.mubr.f32.gmra.mxu0 %v353
        %v469 = vpop.f32.mrf.mxu0
        %v470 = vadd.f32 %v294, %v469
        %v471 = vpop.f32.mrf.mxu0
        %v472 = vadd.f32 %v294, %v471
        %473 = vmatprep.mubr.f32.mxu0 0.0
        %474 = vmatmul.mubr.f32.gmra.mxu0 %v356
        %v475 = vpop.f32.mrf.mxu0
        %v476 = vadd.f32 %v299, %v475
        %v477 = vpop.f32.mrf.mxu0
        %v478 = vadd.f32 %v299, %v477
        %479 = vmatprep.mubr.f32.mxu0 0.0
        %480 = vmatmul.mubr.f32.gmra.mxu0 %v359
        %v481 = vpop.f32.mrf.mxu0
        %v482 = vadd.f32 %v304, %v481
        %v483 = vpop.f32.mrf.mxu0
        %v484 = vadd.f32 %v304, %v483
        %485 = vmatprep.mubr.f32.mxu0 0.0
        %486 = vmatmul.mubr.f32.gmra.mxu0 %v362
        %v487 = vpop.f32.mrf.mxu0
        %v488 = vadd.f32 %v309, %v487
        %v489 = vpop.f32.mrf.mxu0
        %v490 = vadd.f32 %v309, %v489
        %491 = vmatprep.mubr.f32.mxu0 0.0
        %492 = vmatmul.mubr.f32.gmra.mxu0 %v365
        %v493 = vpop.f32.mrf.mxu0
        %v494 = vadd.f32 %v314, %v493
        %v495 = vpop.f32.mrf.mxu0
        %v496 = vadd.f32 %v314, %v495
        %497 = vmatprep.mubr.f32.mxu0 0.0
        %498 = vmatmul.mubr.f32.gmra.mxu0 %v368
        %v499 = vpop.f32.mrf.mxu0
        %v500 = vadd.f32 %v319, %v499
        %v501 = vpop.f32.mrf.mxu0
        %v502 = vadd.f32 %v319, %v501
        %503 = vmatprep.mubr.f32.mxu0 0.0
        %504 = vmatmul.mubr.f32.gmra.mxu0 %v371
        %v505 = vpop.f32.mrf.mxu0
        %v506 = vadd.f32 %v324, %v505
        %v507 = vpop.f32.mrf.mxu0
        %v508 = vadd.f32 %v324, %v507
        %509 = vmatprep.mubr.f32.mxu0 0.0
        %510 = vmatmul.mubr.f32.gmra.mxu0 %v374
        %v511 = vpop.f32.mrf.mxu0
        %v512 = vadd.f32 %v329, %v511
        %v513 = vpop.f32.mrf.mxu0
        %v514 = vadd.f32 %v329, %v513
        %515 = vmatprep.mubr.f32.mxu0 0.0
        %516 = vmatmul.mubr.f32.gmra.mxu0 %v377
        %v517 = vpop.f32.mrf.mxu0
        %v518 = vadd.f32 %v334, %v517
        %v519 = vpop.f32.mrf.mxu0
        %v520 = vadd.f32 %v334, %v519
        %521 = vmatprep.mubr.f32.mxu0 0.0
        %522 = vmatmul.mubr.f32.gmra.mxu0 %v380
        %v523 = vpop.f32.mrf.mxu0
        %v524 = vadd.f32 %v339, %v523
        %v525 = vpop.f32.mrf.mxu0
        %v526 = vadd.f32 %v339, %v525
        %527 = vdwg.mxu0
        %528 = vmatprep.subr.mxu0 0.0
        %529 = vmatpush1.msra.mxu0 0.0
        %530 = vmatprep.subr.mxu0 0.0
        %531 = vmatpush1.msra.mxu0 0.0
        %532 = vmatprep.subr.mxu0 0.0
        %533 = vmatpush1.msra.mxu0 0.0
        %534 = vmatprep.subr.mxu0 0.0
        %535 = vmatpush1.msra.mxu0 0.0
        %536 = vmatprep.subr.mxu0 0.0
        %537 = vmatpush1.msra.mxu0 0.0
        %538 = vmatprep.subr.mxu0 0.0
        %539 = vmatpush1.msra.mxu0 0.0
        %540 = vmatprep.subr.mxu0 0.0
        %541 = vmatpush1.msra.mxu0 0.0
        %542 = vmatprep.subr.mxu0 0.0
        %543 = vmatpush1.msra.mxu0 0.0
        %544 = vmatprep.subr.mxu0 0.0
        %545 = vmatpush1.msra.mxu0 0.0
        %546 = vmatprep.subr.mxu0 0.0
        %547 = vmatpush1.msra.mxu0 0.0
        %548 = vmatprep.subr.mxu0 0.0
        %549 = vmatpush1.msra.mxu0 0.0
        %550 = vmatprep.subr.mxu0 0.0
        %551 = vmatpush1.msra.mxu0 0.0
        %552 = vmatprep.subr.mxu0 0.0
        %553 = vmatpush1.msra.mxu0 0.0
        %554 = vmatprep.subr.mxu0 0.0
        %555 = vmatpush1.msra.mxu0 0.0
        %556 = vmatprep.subr.mxu0 0.0
        %557 = vmatpush1.msra.mxu0 0.0
        %558 = vmatprep.subr.mxu0 %v389
        %559 = vmatpush1.msra.mxu0 %v387
        %560 = vmatprep.subr.mxu0 0.0
        %561 = vmatpush2.msra.mxu0 0.0
        %562 = vmatprep.subr.mxu0 0.0
        %563 = vmatpush2.msra.mxu0 0.0
        %564 = vmatprep.subr.mxu0 0.0
        %565 = vmatpush2.msra.mxu0 0.0
        %566 = vmatprep.subr.mxu0 0.0
        %567 = vmatpush2.msra.mxu0 0.0
        %568 = vmatprep.subr.mxu0 0.0
        %569 = vmatpush2.msra.mxu0 0.0
        %570 = vmatprep.subr.mxu0 0.0
        %571 = vmatpush2.msra.mxu0 0.0
        %572 = vmatprep.subr.mxu0 0.0
        %573 = vmatpush2.msra.mxu0 0.0
        %574 = vmatprep.subr.mxu0 0.0
        %575 = vmatpush2.msra.mxu0 0.0
        %576 = vmatprep.subr.mxu0 0.0
        %577 = vmatpush2.msra.mxu0 0.0
        %578 = vmatprep.subr.mxu0 0.0
        %579 = vmatpush2.msra.mxu0 0.0
        %580 = vmatprep.subr.mxu0 0.0
        %581 = vmatpush2.msra.mxu0 0.0
        %582 = vmatprep.subr.mxu0 0.0
        %583 = vmatpush2.msra.mxu0 0.0
        %584 = vmatprep.subr.mxu0 0.0
        %585 = vmatpush2.msra.mxu0 0.0
        %586 = vmatprep.subr.mxu0 0.0
        %587 = vmatpush2.msra.mxu0 0.0
        %588 = vmatprep.subr.mxu0 0.0
        %589 = vmatpush2.msra.mxu0 0.0
        %590 = vmatprep.subr.mxu0 0.0
        %591 = vmatpush2.msra.mxu0 0.0
        %592 = vmatprep.mubr.f32.mxu0 0.0
        %593 = vmatmul.mubr.f32.gmra.mxu0 %v347
        %v594 = vpop.f32.mrf.mxu0
        %v595 = vadd.f32 %v284, %v594
        %v596 = vpop.f32.mrf.mxu0
        %v597 = vadd.f32 %v284, %v596
        %598 = vmatprep.mubr.f32.mxu0 0.0
        %599 = vmatmul.mubr.f32.gmra.mxu0 %v350
        %v600 = vpop.f32.mrf.mxu0
        %v601 = vadd.f32 %v289, %v600
        %v602 = vpop.f32.mrf.mxu0
        %v603 = vadd.f32 %v289, %v602
        %604 = vmatprep.mubr.f32.mxu0 0.0
        %605 = vmatmul.mubr.f32.gmra.mxu0 %v353
        %v606 = vpop.f32.mrf.mxu0
        %v607 = vadd.f32 %v294, %v606
        %v608 = vpop.f32.mrf.mxu0
        %v609 = vadd.f32 %v294, %v608
        %610 = vmatprep.mubr.f32.mxu0 0.0
        %611 = vmatmul.mubr.f32.gmra.mxu0 %v356
        %v612 = vpop.f32.mrf.mxu0
        %v613 = vadd.f32 %v299, %v612
        %v614 = vpop.f32.mrf.mxu0
        %v615 = vadd.f32 %v299, %v614
        %616 = vmatprep.mubr.f32.mxu0 0.0
        %617 = vmatmul.mubr.f32.gmra.mxu0 %v359
        %v618 = vpop.f32.mrf.mxu0
        %v619 = vadd.f32 %v304, %v618
        %v620 = vpop.f32.mrf.mxu0
        %v621 = vadd.f32 %v304, %v620
        %622 = vmatprep.mubr.f32.mxu0 0.0
        %623 = vmatmul.mubr.f32.gmra.mxu0 %v362
        %v624 = vpop.f32.mrf.mxu0
        %v625 = vadd.f32 %v309, %v624
        %v626 = vpop.f32.mrf.mxu0
        %v627 = vadd.f32 %v309, %v626
        %628 = vmatprep.mubr.f32.mxu0 0.0
        %629 = vmatmul.mubr.f32.gmra.mxu0 %v365
        %v630 = vpop.f32.mrf.mxu0
        %v631 = vadd.f32 %v314, %v630
        %v632 = vpop.f32.mrf.mxu0
        %v633 = vadd.f32 %v314, %v632
        %634 = vmatprep.mubr.f32.mxu0 0.0
        %635 = vmatmul.mubr.f32.gmra.mxu0 %v368
        %v636 = vpop.f32.mrf.mxu0
        %v637 = vadd.f32 %v319, %v636
        %v638 = vpop.f32.mrf.mxu0
        %v639 = vadd.f32 %v319, %v638
        %640 = vmatprep.mubr.f32.mxu0 0.0
        %641 = vmatmul.mubr.f32.gmra.mxu0 %v371
        %v642 = vpop.f32.mrf.mxu0
        %v643 = vadd.f32 %v324, %v642
        %v644 = vpop.f32.mrf.mxu0
        %v645 = vadd.f32 %v324, %v644
        %646 = vmatprep.mubr.f32.mxu0 0.0
        %647 = vmatmul.mubr.f32.gmra.mxu0 %v374
        %v648 = vpop.f32.mrf.mxu0
        %v649 = vadd.f32 %v329, %v648
        %v650 = vpop.f32.mrf.mxu0
        %v651 = vadd.f32 %v329, %v650
        %652 = vmatprep.mubr.f32.mxu0 0.0
        %653 = vmatmul.mubr.f32.gmra.mxu0 %v377
        %v654 = vpop.f32.mrf.mxu0
        %v655 = vadd.f32 %v334, %v654
        %v656 = vpop.f32.mrf.mxu0
        %v657 = vadd.f32 %v334, %v656
        %658 = vmatprep.mubr.f32.mxu0 0.0
        %659 = vmatmul.mubr.f32.gmra.mxu0 %v380
        %v660 = vpop.f32.mrf.mxu0
        %v661 = vadd.f32 %v339, %v660
        %v662 = vpop.f32.mrf.mxu0
        %v663 = vadd.f32 %v339, %v662
        %664 = vdwg.mxu0
        %v665 = vmax.f32 %v458, 0.0
        %v666 = vmax.f32 %v460, 0.0
        %v667 = vmax.f32 %v595, 0.0
        %v668 = vmax.f32 %v597, 0.0
        %v669 = vmax.f32 %v464, 0.0
        %v670 = vmax.f32 %v466, 0.0
        %v671 = vmax.f32 %v601, 0.0
        %v672 = vmax.f32 %v603, 0.0
        %v673 = vmax.f32 %v470, 0.0
        %v674 = vmax.f32 %v472, 0.0
        %v675 = vmax.f32 %v607, 0.0
        %v676 = vmax.f32 %v609, 0.0
        %v677 = vmax.f32 %v476, 0.0
        %v678 = vmax.f32 %v478, 0.0
        %v679 = vmax.f32 %v613, 0.0
        %v680 = vmax.f32 %v615, 0.0
        %v681 = vmax.f32 %v482, 0.0
        %v682 = vmax.f32 %v484, 0.0
        %v683 = vmax.f32 %v619, 0.0
        %v684 = vmax.f32 %v621, 0.0
        %v685 = vmax.f32 %v488, 0.0
        %v686 = vmax.f32 %v490, 0.0
        %v687 = vmax.f32 %v625, 0.0
        %v688 = vmax.f32 %v627, 0.0
        %v689 = vmax.f32 %v494, 0.0
        %v690 = vmax.f32 %v496, 0.0
        %v691 = vmax.f32 %v631, 0.0
        %v692 = vmax.f32 %v633, 0.0
        %v693 = vmax.f32 %v500, 0.0
        %v694 = vmax.f32 %v502, 0.0
        %v695 = vmax.f32 %v637, 0.0
        %v696 = vmax.f32 %v639, 0.0
        %v697 = vmax.f32 %v506, 0.0
        %v698 = vmax.f32 %v508, 0.0
        %v699 = vmax.f32 %v643, 0.0
        %v700 = vmax.f32 %v645, 0.0
        %v701 = vmax.f32 %v512, 0.0
        %v702 = vmax.f32 %v514, 0.0
        %v703 = vmax.f32 %v649, 0.0
        %v704 = vmax.f32 %v651, 0.0
        %v705 = vmax.f32 %v518, 0.0
        %v706 = vmax.f32 %v520, 0.0
        %v707 = vmax.f32 %v655, 0.0
        %v708 = vmax.f32 %v657, 0.0
        %v709 = vmax.f32 %v524, 0.0
        %v710 = vmax.f32 %v526, 0.0
        %v711 = vmax.f32 %v661, 0.0
        %v712 = vmax.f32 %v663, 0.0
        %v713 = vld [vmem:[%s2] sm:$0xff]
        %v714 = vld [vmem:[%s2 + $0x8] sm:$0xff]
        %v715 = vld [vmem:[%s2 + $0x10] sm:$0xff]
        %v716 = vld [vmem:[%s2 + $0x18] sm:$0xff]
        %v717 = vld [vmem:[%s2 + $0x20] sm:$0x1]
        %718 = vset.pattern.permute.xlu0 1
        %719 = vperm.xlu0 %718, %v255
        %v720 = vpop.permute.xlu0 %719
        %722 = vset.pattern.permute.xlu0 1
        %723 = vperm.xlu0 %722, %v256
        %v724 = vpop.permute.xlu0 %723
        %726 = vset.pattern.permute.xlu0 1
        %727 = vperm.xlu0 %726, %v257
        %v728 = vpop.permute.xlu0 %727
        %730 = vset.pattern.permute.xlu0 1
        %731 = vperm.xlu0 %730, %v258
        %v732 = vpop.permute.xlu0 %731
        %735 = vset.pattern.permute.xlu0 1
        %736 = vperm.xlu0 %735, %v267
        %v737 = vpop.permute.xlu0 %736
        %vm739 = vcmask 785408
        %v741 = vsel %vm739, %v713, 0
        %v744 = vsel %vm739, %v714, 0
        %v747 = vsel %vm739, %v715, 0
        %v750 = vsel %vm739, %v716, 0
        %v753 = vsel %vm739, %v717, 0
        %755 = vmatprep.subr.mxu0 0.0
        %756 = vmatpush1.msra.mxu0 0.0
        %757 = vmatprep.subr.mxu0 0.0
        %758 = vmatpush1.msra.mxu0 0.0
        %759 = vmatprep.subr.mxu0 0.0
        %760 = vmatpush1.msra.mxu0 0.0
        %761 = vmatprep.subr.mxu0 0.0
        %762 = vmatpush1.msra.mxu0 0.0
        %763 = vmatprep.subr.mxu0 %v710
        %764 = vmatpush1.msra.mxu0 %v709
        %765 = vmatprep.subr.mxu0 %v706
        %766 = vmatpush1.msra.mxu0 %v705
        %767 = vmatprep.subr.mxu0 %v702
        %768 = vmatpush1.msra.mxu0 %v701
        %769 = vmatprep.subr.mxu0 %v698
        %770 = vmatpush1.msra.mxu0 %v697
        %771 = vmatprep.subr.mxu0 %v694
        %772 = vmatpush1.msra.mxu0 %v693
        %773 = vmatprep.subr.mxu0 %v690
        %774 = vmatpush1.msra.mxu0 %v689
        %775 = vmatprep.subr.mxu0 %v686
        %776 = vmatpush1.msra.mxu0 %v685
        %777 = vmatprep.subr.mxu0 %v682
        %778 = vmatpush1.msra.mxu0 %v681
        %779 = vmatprep.subr.mxu0 %v678
        %780 = vmatpush1.msra.mxu0 %v677
        %781 = vmatprep.subr.mxu0 %v674
        %782 = vmatpush1.msra.mxu0 %v673
        %783 = vmatprep.subr.mxu0 %v670
        %784 = vmatpush1.msra.mxu0 %v669
        %785 = vmatprep.subr.mxu0 %v666
        %786 = vmatpush1.msra.mxu0 %v665
        %787 = vmatprep.subr.mxu0 0.0
        %788 = vmatpush2.msra.mxu0 0.0
        %789 = vmatprep.subr.mxu0 0.0
        %790 = vmatpush2.msra.mxu0 0.0
        %791 = vmatprep.subr.mxu0 0.0
        %792 = vmatpush2.msra.mxu0 0.0
        %793 = vmatprep.subr.mxu0 0.0
        %794 = vmatpush2.msra.mxu0 0.0
        %795 = vmatprep.subr.mxu0 0.0
        %796 = vmatpush2.msra.mxu0 0.0
        %797 = vmatprep.subr.mxu0 0.0
        %798 = vmatpush2.msra.mxu0 0.0
        %799 = vmatprep.subr.mxu0 0.0
        %800 = vmatpush2.msra.mxu0 0.0
        %801 = vmatprep.subr.mxu0 0.0
        %802 = vmatpush2.msra.mxu0 0.0
        %803 = vmatprep.subr.mxu0 0.0
        %804 = vmatpush2.msra.mxu0 0.0
        %805 = vmatprep.subr.mxu0 0.0
        %806 = vmatpush2.msra.mxu0 0.0
        %807 = vmatprep.subr.mxu0 0.0
        %808 = vmatpush2.msra.mxu0 0.0
        %809 = vmatprep.subr.mxu0 0.0
        %810 = vmatpush2.msra.mxu0 0.0
        %811 = vmatprep.subr.mxu0 0.0
        %812 = vmatpush2.msra.mxu0 0.0
        %813 = vmatprep.subr.mxu0 0.0
        %814 = vmatpush2.msra.mxu0 0.0
        %815 = vmatprep.subr.mxu0 0.0
        %816 = vmatpush2.msra.mxu0 0.0
        %817 = vmatprep.subr.mxu0 0.0
        %818 = vmatpush2.msra.mxu0 0.0
        %819 = vmatprep.mubr.f32.mxu0 0.0
        %820 = vmatmul.mubr.f32.gmra.mxu0 %v741
        %v821 = vpop.f32.mrf.mxu0
        %v822 = vadd.f32 %v720, %v821
        %v823 = vpop.f32.mrf.mxu0
        %v824 = vadd.f32 %v720, %v823
        %825 = vmatprep.mubr.f32.mxu0 0.0
        %826 = vmatmul.mubr.f32.gmra.mxu0 %v744
        %v827 = vpop.f32.mrf.mxu0
        %v828 = vadd.f32 %v724, %v827
        %v829 = vpop.f32.mrf.mxu0
        %v830 = vadd.f32 %v724, %v829
        %831 = vmatprep.mubr.f32.mxu0 0.0
        %832 = vmatmul.mubr.f32.gmra.mxu0 %v747
        %v833 = vpop.f32.mrf.mxu0
        %v834 = vadd.f32 %v728, %v833
        %v835 = vpop.f32.mrf.mxu0
        %v836 = vadd.f32 %v728, %v835
        %837 = vmatprep.mubr.f32.mxu0 0.0
        %838 = vmatmul.mubr.f32.gmra.mxu0 %v750
        %v839 = vpop.f32.mrf.mxu0
        %v840 = vadd.f32 %v732, %v839
        %v841 = vpop.f32.mrf.mxu0
        %v842 = vadd.f32 %v732, %v841
        %843 = vmatprep.mubr.f32.mxu0 0.0
        %844 = vmatmul.mubr.f32.gmra.mxu0 %v753
        %v845 = vpop.f32.mrf.mxu0
        %v846 = vadd.f32 %v737, %v845
        %v847 = vpop.f32.mrf.mxu0
        %v848 = vadd.f32 %v737, %v847
        %849 = vdwg.mxu0
        %850 = vmatprep.subr.mxu0 0.0
        %851 = vmatpush1.msra.mxu0 0.0
        %852 = vmatprep.subr.mxu0 0.0
        %853 = vmatpush1.msra.mxu0 0.0
        %854 = vmatprep.subr.mxu0 0.0
        %855 = vmatpush1.msra.mxu0 0.0
        %856 = vmatprep.subr.mxu0 0.0
        %857 = vmatpush1.msra.mxu0 0.0
        %858 = vmatprep.subr.mxu0 %v712
        %859 = vmatpush1.msra.mxu0 %v711
        %860 = vmatprep.subr.mxu0 %v708
        %861 = vmatpush1.msra.mxu0 %v707
        %862 = vmatprep.subr.mxu0 %v704
        %863 = vmatpush1.msra.mxu0 %v703
        %864 = vmatprep.subr.mxu0 %v700
        %865 = vmatpush1.msra.mxu0 %v699
        %866 = vmatprep.subr.mxu0 %v696
        %867 = vmatpush1.msra.mxu0 %v695
        %868 = vmatprep.subr.mxu0 %v692
        %869 = vmatpush1.msra.mxu0 %v691
        %870 = vmatprep.subr.mxu0 %v688
        %871 = vmatpush1.msra.mxu0 %v687
        %872 = vmatprep.subr.mxu0 %v684
        %873 = vmatpush1.msra.mxu0 %v683
        %874 = vmatprep.subr.mxu0 %v680
        %875 = vmatpush1.msra.mxu0 %v679
        %876 = vmatprep.subr.mxu0 %v676
        %877 = vmatpush1.msra.mxu0 %v675
        %878 = vmatprep.subr.mxu0 %v672
        %879 = vmatpush1.msra.mxu0 %v671
        %880 = vmatprep.subr.mxu0 %v668
        %881 = vmatpush1.msra.mxu0 %v667
        %882 = vmatprep.subr.mxu0 0.0
        %883 = vmatpush2.msra.mxu0 0.0
        %884 = vmatprep.subr.mxu0 0.0
        %885 = vmatpush2.msra.mxu0 0.0
        %886 = vmatprep.subr.mxu0 0.0
        %887 = vmatpush2.msra.mxu0 0.0
        %888 = vmatprep.subr.mxu0 0.0
        %889 = vmatpush2.msra.mxu0 0.0
        %890 = vmatprep.subr.mxu0 0.0
        %891 = vmatpush2.msra.mxu0 0.0
        %892 = vmatprep.subr.mxu0 0.0
        %893 = vmatpush2.msra.mxu0 0.0
        %894 = vmatprep.subr.mxu0 0.0
        %895 = vmatpush2.msra.mxu0 0.0
        %896 = vmatprep.subr.mxu0 0.0
        %897 = vmatpush2.msra.mxu0 0.0
        %898 = vmatprep.subr.mxu0 0.0
        %899 = vmatpush2.msra.mxu0 0.0
        %900 = vmatprep.subr.mxu0 0.0
        %901 = vmatpush2.msra.mxu0 0.0
        %902 = vmatprep.subr.mxu0 0.0
        %903 = vmatpush2.msra.mxu0 0.0
        %904 = vmatprep.subr.mxu0 0.0
        %905 = vmatpush2.msra.mxu0 0.0
        %906 = vmatprep.subr.mxu0 0.0
        %907 = vmatpush2.msra.mxu0 0.0
        %908 = vmatprep.subr.mxu0 0.0
        %909 = vmatpush2.msra.mxu0 0.0
        %910 = vmatprep.subr.mxu0 0.0
        %911 = vmatpush2.msra.mxu0 0.0
        %912 = vmatprep.subr.mxu0 0.0
        %913 = vmatpush2.msra.mxu0 0.0
        %914 = vmatprep.mubr.f32.mxu0 0.0
        %915 = vmatmul.mubr.f32.gmra.mxu0 %v741
        %v916 = vpop.f32.mrf.mxu0
        %v917 = vadd.f32 %v720, %v916
        %v918 = vpop.f32.mrf.mxu0
        %v919 = vadd.f32 %v720, %v918
        %920 = vmatprep.mubr.f32.mxu0 0.0
        %921 = vmatmul.mubr.f32.gmra.mxu0 %v744
        %v922 = vpop.f32.mrf.mxu0
        %v923 = vadd.f32 %v724, %v922
        %v924 = vpop.f32.mrf.mxu0
        %v925 = vadd.f32 %v724, %v924
        %926 = vmatprep.mubr.f32.mxu0 0.0
        %927 = vmatmul.mubr.f32.gmra.mxu0 %v747
        %v928 = vpop.f32.mrf.mxu0
        %v929 = vadd.f32 %v728, %v928
        %v930 = vpop.f32.mrf.mxu0
        %v931 = vadd.f32 %v728, %v930
        %932 = vmatprep.mubr.f32.mxu0 0.0
        %933 = vmatmul.mubr.f32.gmra.mxu0 %v750
        %v934 = vpop.f32.mrf.mxu0
        %v935 = vadd.f32 %v732, %v934
        %v936 = vpop.f32.mrf.mxu0
        %v937 = vadd.f32 %v732, %v936
        %938 = vmatprep.mubr.f32.mxu0 0.0
        %939 = vmatmul.mubr.f32.gmra.mxu0 %v753
        %v940 = vpop.f32.mrf.mxu0
        %v941 = vadd.f32 %v737, %v940
        %v942 = vpop.f32.mrf.mxu0
        %v943 = vadd.f32 %v737, %v942
        %944 = vdwg.mxu0
        %v945 = vmax.f32 %v822, 0.0
        %v946 = vmax.f32 %v824, 0.0
        %v947 = vmax.f32 %v917, 0.0
        %v948 = vmax.f32 %v919, 0.0
        %v949 = vmax.f32 %v828, 0.0
        %v950 = vmax.f32 %v830, 0.0
        %v951 = vmax.f32 %v923, 0.0
        %v952 = vmax.f32 %v925, 0.0
        %v953 = vmax.f32 %v834, 0.0
        %v954 = vmax.f32 %v836, 0.0
        %v955 = vmax.f32 %v929, 0.0
        %v956 = vmax.f32 %v931, 0.0
        %v957 = vmax.f32 %v840, 0.0
        %v958 = vmax.f32 %v842, 0.0
        %v959 = vmax.f32 %v935, 0.0
        %v960 = vmax.f32 %v937, 0.0
        %v961 = vmax.f32 %v846, 0.0
        %v962 = vmax.f32 %v848, 0.0
        %v963 = vmax.f32 %v941, 0.0
        %v964 = vmax.f32 %v943, 0.0
        %v965 = vld [vmem:[%s3] sm:$0xff]
        %v966 = vld [vmem:[%s3 + $0x8] sm:$0xff]
        %v967 = vld [vmem:[%s3 + $0x10] sm:$0xff]
        %v968 = vld [vmem:[%s3 + $0x18] sm:$0xff]
        %v969 = vld [vmem:[%s3 + $0x20] sm:$0xff]
        %v970 = vld [vmem:[%s3 + $0x28] sm:$0xff]
        %v971 = vld [vmem:[%s3 + $0x30] sm:$0xff]
        %v972 = vld [vmem:[%s3 + $0x38] sm:$0xff]
        %973 = vset.pattern.permute.xlu0 2
        %974 = vperm.xlu0 %973, %v255
        %v975 = vpop.permute.xlu0 %974
        %977 = vset.pattern.permute.xlu0 2
        %978 = vperm.xlu0 %977, %v256
        %v979 = vpop.permute.xlu0 %978
        %981 = vset.pattern.permute.xlu0 2
        %982 = vperm.xlu0 %981, %v257
        %v983 = vpop.permute.xlu0 %982
        %985 = vset.pattern.permute.xlu0 2
        %986 = vperm.xlu0 %985, %v258
        %v987 = vpop.permute.xlu0 %986
        %989 = vset.pattern.permute.xlu0 2
        %990 = vperm.xlu0 %989, %v259
        %v991 = vpop.permute.xlu0 %990
        %993 = vset.pattern.permute.xlu0 2
        %994 = vperm.xlu0 %993, %v260
        %v995 = vpop.permute.xlu0 %994
        %997 = vset.pattern.permute.xlu0 2
        %998 = vperm.xlu0 %997, %v261
        %v999 = vpop.permute.xlu0 %998
        %1001 = vset.pattern.permute.xlu0 2
        %1002 = vperm.xlu0 %1001, %v262
        %v1003 = vpop.permute.xlu0 %1002
        %vm1005 = vcmask 269312
        %v1007 = vsel %vm1005, %v965, 0
        %v1010 = vsel %vm1005, %v966, 0
        %v1013 = vsel %vm1005, %v967, 0
        %v1016 = vsel %vm1005, %v968, 0
        %v1019 = vsel %vm1005, %v969, 0
        %v1022 = vsel %vm1005, %v970, 0
        %v1025 = vsel %vm1005, %v971, 0
        %v1028 = vsel %vm1005, %v972, 0
        %vm1030 = vcmask 1040384
        %v1032 = vsel %vm1030, %v961, 0
        %v1035 = vsel %vm1030, %v962, 0
        %v1038 = vsel %vm1030, %v963, 0
        %v1041 = vsel %vm1030, %v964, 0
        %1043 = vmatprep.subr.mxu0 0.0
        %1044 = vmatpush1.msra.mxu0 0.0
        %1045 = vmatprep.subr.mxu0 0.0
        %1046 = vmatpush1.msra.mxu0 0.0
        %1047 = vmatprep.subr.mxu0 0.0
        %1048 = vmatpush1.msra.mxu0 0.0
        %1049 = vmatprep.subr.mxu0 0.0
        %1050 = vmatpush1.msra.mxu0 0.0
        %1051 = vmatprep.subr.mxu0 0.0
        %1052 = vmatpush1.msra.mxu0 0.0
        %1053 = vmatprep.subr.mxu0 0.0
        %1054 = vmatpush1.msra.mxu0 0.0
        %1055 = vmatprep.subr.mxu0 0.0
        %1056 = vmatpush1.msra.mxu0 0.0
        %1057 = vmatprep.subr.mxu0 0.0
        %1058 = vmatpush1.msra.mxu0 0.0
        %1059 = vmatprep.subr.mxu0 0.0
        %1060 = vmatpush1.msra.mxu0 0.0
        %1061 = vmatprep.subr.mxu0 0.0
        %1062 = vmatpush1.msra.mxu0 0.0
        %1063 = vmatprep.subr.mxu0 0.0
        %1064 = vmatpush1.msra.mxu0 0.0
        %1065 = vmatprep.subr.mxu0 %v1035
        %1066 = vmatpush1.msra.mxu0 %v1032
        %1067 = vmatprep.subr.mxu0 %v958
        %1068 = vmatpush1.msra.mxu0 %v957
        %1069 = vmatprep.subr.mxu0 %v954
        %1070 = vmatpush1.msra.mxu0 %v953
        %1071 = vmatprep.subr.mxu0 %v950
        %1072 = vmatpush1.msra.mxu0 %v949
        %1073 = vmatprep.subr.mxu0 %v946
        %1074 = vmatpush1.msra.mxu0 %v945
        %1075 = vmatprep.subr.mxu0 0.0
        %1076 = vmatpush2.msra.mxu0 0.0
        %1077 = vmatprep.subr.mxu0 0.0
        %1078 = vmatpush2.msra.mxu0 0.0
        %1079 = vmatprep.subr.mxu0 0.0
        %1080 = vmatpush2.msra.mxu0 0.0
        %1081 = vmatprep.subr.mxu0 0.0
        %1082 = vmatpush2.msra.mxu0 0.0
        %1083 = vmatprep.subr.mxu0 0.0
        %1084 = vmatpush2.msra.mxu0 0.0
        %1085 = vmatprep.subr.mxu0 0.0
        %1086 = vmatpush2.msra.mxu0 0.0
        %1087 = vmatprep.subr.mxu0 0.0
        %1088 = vmatpush2.msra.mxu0 0.0
        %1089 = vmatprep.subr.mxu0 0.0
        %1090 = vmatpush2.msra.mxu0 0.0
        %1091 = vmatprep.subr.mxu0 0.0
        %1092 = vmatpush2.msra.mxu0 0.0
        %1093 = vmatprep.subr.mxu0 0.0
        %1094 = vmatpush2.msra.mxu0 0.0
        %1095 = vmatprep.subr.mxu0 0.0
        %1096 = vmatpush2.msra.mxu0 0.0
        %1097 = vmatprep.subr.mxu0 0.0
        %1098 = vmatpush2.msra.mxu0 0.0
        %1099 = vmatprep.subr.mxu0 0.0
        %1100 = vmatpush2.msra.mxu0 0.0
        %1101 = vmatprep.subr.mxu0 0.0
        %1102 = vmatpush2.msra.mxu0 0.0
        %1103 = vmatprep.subr.mxu0 0.0
        %1104 = vmatpush2.msra.mxu0 0.0
        %1105 = vmatprep.subr.mxu0 0.0
        %1106 = vmatpush2.msra.mxu0 0.0
        %1107 = vmatprep.mubr.f32.mxu0 0.0
        %1108 = vmatmul.mubr.f32.gmra.mxu0 %v1007
        %v1109 = vpop.f32.mrf.mxu0
        %v1110 = vadd.f32 %v975, %v1109
        %v1111 = vpop.f32.mrf.mxu0
        %v1112 = vadd.f32 %v975, %v1111
        %1113 = vmatprep.mubr.f32.mxu0 0.0
        %1114 = vmatmul.mubr.f32.gmra.mxu0 %v1010
        %v1115 = vpop.f32.mrf.mxu0
        %v1116 = vadd.f32 %v979, %v1115
        %v1117 = vpop.f32.mrf.mxu0
        %v1118 = vadd.f32 %v979, %v1117
        %1119 = vmatprep.mubr.f32.mxu0 0.0
        %1120 = vmatmul.mubr.f32.gmra.mxu0 %v1013
        %v1121 = vpop.f32.mrf.mxu0
        %v1122 = vadd.f32 %v983, %v1121
        %v1123 = vpop.f32.mrf.mxu0
        %v1124 = vadd.f32 %v983, %v1123
        %1125 = vmatprep.mubr.f32.mxu0 0.0
        %1126 = vmatmul.mubr.f32.gmra.mxu0 %v1016
        %v1127 = vpop.f32.mrf.mxu0
        %v1128 = vadd.f32 %v987, %v1127
        %v1129 = vpop.f32.mrf.mxu0
        %v1130 = vadd.f32 %v987, %v1129
        %1131 = vmatprep.mubr.f32.mxu0 0.0
        %1132 = vmatmul.mubr.f32.gmra.mxu0 %v1019
        %v1133 = vpop.f32.mrf.mxu0
        %v1134 = vadd.f32 %v991, %v1133
        %v1135 = vpop.f32.mrf.mxu0
        %v1136 = vadd.f32 %v991, %v1135
        %1137 = vmatprep.mubr.f32.mxu0 0.0
        %1138 = vmatmul.mubr.f32.gmra.mxu0 %v1022
        %v1139 = vpop.f32.mrf.mxu0
        %v1140 = vadd.f32 %v995, %v1139
        %v1141 = vpop.f32.mrf.mxu0
        %v1142 = vadd.f32 %v995, %v1141
        %1143 = vmatprep.mubr.f32.mxu0 0.0
        %1144 = vmatmul.mubr.f32.gmra.mxu0 %v1025
        %v1145 = vpop.f32.mrf.mxu0
        %v1146 = vadd.f32 %v999, %v1145
        %v1147 = vpop.f32.mrf.mxu0
        %v1148 = vadd.f32 %v999, %v1147
        %1149 = vmatprep.mubr.f32.mxu0 0.0
        %1150 = vmatmul.mubr.f32.gmra.mxu0 %v1028
        %v1151 = vpop.f32.mrf.mxu0
        %v1152 = vadd.f32 %v1003, %v1151
        %v1153 = vpop.f32.mrf.mxu0
        %v1154 = vadd.f32 %v1003, %v1153
        %1155 = vdwg.mxu0
        %1156 = vmatprep.subr.mxu0 0.0
        %1157 = vmatpush1.msra.mxu0 0.0
        %1158 = vmatprep.subr.mxu0 0.0
        %1159 = vmatpush1.msra.mxu0 0.0
        %1160 = vmatprep.subr.mxu0 0.0
        %1161 = vmatpush1.msra.mxu0 0.0
        %1162 = vmatprep.subr.mxu0 0.0
        %1163 = vmatpush1.msra.mxu0 0.0
        %1164 = vmatprep.subr.mxu0 0.0
        %1165 = vmatpush1.msra.mxu0 0.0
        %1166 = vmatprep.subr.mxu0 0.0
        %1167 = vmatpush1.msra.mxu0 0.0
        %1168 = vmatprep.subr.mxu0 0.0
        %1169 = vmatpush1.msra.mxu0 0.0
        %1170 = vmatprep.subr.mxu0 0.0
        %1171 = vmatpush1.msra.mxu0 0.0
        %1172 = vmatprep.subr.mxu0 0.0
        %1173 = vmatpush1.msra.mxu0 0.0
        %1174 = vmatprep.subr.mxu0 0.0
        %1175 = vmatpush1.msra.mxu0 0.0
        %1176 = vmatprep.subr.mxu0 0.0
        %1177 = vmatpush1.msra.mxu0 0.0
        %1178 = vmatprep.subr.mxu0 %v1041
        %1179 = vmatpush1.msra.mxu0 %v1038
        %1180 = vmatprep.subr.mxu0 %v960
        %1181 = vmatpush1.msra.mxu0 %v959
        %1182 = vmatprep.subr.mxu0 %v956
        %1183 = vmatpush1.msra.mxu0 %v955
        %1184 = vmatprep.subr.mxu0 %v952
        %1185 = vmatpush1.msra.mxu0 %v951
        %1186 = vmatprep.subr.mxu0 %v948
        %1187 = vmatpush1.msra.mxu0 %v947
        %1188 = vmatprep.subr.mxu0 0.0
        %1189 = vmatpush2.msra.mxu0 0.0
        %1190 = vmatprep.subr.mxu0 0.0
        %1191 = vmatpush2.msra.mxu0 0.0
        %1192 = vmatprep.subr.mxu0 0.0
        %1193 = vmatpush2.msra.mxu0 0.0
        %1194 = vmatprep.subr.mxu0 0.0
        %1195 = vmatpush2.msra.mxu0 0.0
        %1196 = vmatprep.subr.mxu0 0.0
        %1197 = vmatpush2.msra.mxu0 0.0
        %1198 = vmatprep.subr.mxu0 0.0
        %1199 = vmatpush2.msra.mxu0 0.0
        %1200 = vmatprep.subr.mxu0 0.0
        %1201 = vmatpush2.msra.mxu0 0.0
        %1202 = vmatprep.subr.mxu0 0.0
        %1203 = vmatpush2.msra.mxu0 0.0
        %1204 = vmatprep.subr.mxu0 0.0
        %1205 = vmatpush2.msra.mxu0 0.0
        %1206 = vmatprep.subr.mxu0 0.0
        %1207 = vmatpush2.msra.mxu0 0.0
        %1208 = vmatprep.subr.mxu0 0.0
        %1209 = vmatpush2.msra.mxu0 0.0
        %1210 = vmatprep.subr.mxu0 0.0
        %1211 = vmatpush2.msra.mxu0 0.0
        %1212 = vmatprep.subr.mxu0 0.0
        %1213 = vmatpush2.msra.mxu0 0.0
        %1214 = vmatprep.subr.mxu0 0.0
        %1215 = vmatpush2.msra.mxu0 0.0
        %1216 = vmatprep.subr.mxu0 0.0
        %1217 = vmatpush2.msra.mxu0 0.0
        %1218 = vmatprep.subr.mxu0 0.0
        %1219 = vmatpush2.msra.mxu0 0.0
        %1220 = vmatprep.mubr.f32.mxu0 0.0
        %1221 = vmatmul.mubr.f32.gmra.mxu0 %v1007
        %v1222 = vpop.f32.mrf.mxu0
        %v1223 = vadd.f32 %v975, %v1222
        %v1224 = vpop.f32.mrf.mxu0
        %v1225 = vadd.f32 %v975, %v1224
        %1226 = vmatprep.mubr.f32.mxu0 0.0
        %1227 = vmatmul.mubr.f32.gmra.mxu0 %v1010
        %v1228 = vpop.f32.mrf.mxu0
        %v1229 = vadd.f32 %v979, %v1228
        %v1230 = vpop.f32.mrf.mxu0
        %v1231 = vadd.f32 %v979, %v1230
        %1232 = vmatprep.mubr.f32.mxu0 0.0
        %1233 = vmatmul.mubr.f32.gmra.mxu0 %v1013
        %v1234 = vpop.f32.mrf.mxu0
        %v1235 = vadd.f32 %v983, %v1234
        %v1236 = vpop.f32.mrf.mxu0
        %v1237 = vadd.f32 %v983, %v1236
        %1238 = vmatprep.mubr.f32.mxu0 0.0
        %1239 = vmatmul.mubr.f32.gmra.mxu0 %v1016
        %v1240 = vpop.f32.mrf.mxu0
        %v1241 = vadd.f32 %v987, %v1240
        %v1242 = vpop.f32.mrf.mxu0
        %v1243 = vadd.f32 %v987, %v1242
        %1244 = vmatprep.mubr.f32.mxu0 0.0
        %1245 = vmatmul.mubr.f32.gmra.mxu0 %v1019
        %v1246 = vpop.f32.mrf.mxu0
        %v1247 = vadd.f32 %v991, %v1246
        %v1248 = vpop.f32.mrf.mxu0
        %v1249 = vadd.f32 %v991, %v1248
        %1250 = vmatprep.mubr.f32.mxu0 0.0
        %1251 = vmatmul.mubr.f32.gmra.mxu0 %v1022
        %v1252 = vpop.f32.mrf.mxu0
        %v1253 = vadd.f32 %v995, %v1252
        %v1254 = vpop.f32.mrf.mxu0
        %v1255 = vadd.f32 %v995, %v1254
        %1256 = vmatprep.mubr.f32.mxu0 0.0
        %1257 = vmatmul.mubr.f32.gmra.mxu0 %v1025
        %v1258 = vpop.f32.mrf.mxu0
        %v1259 = vadd.f32 %v999, %v1258
        %v1260 = vpop.f32.mrf.mxu0
        %v1261 = vadd.f32 %v999, %v1260
        %1262 = vmatprep.mubr.f32.mxu0 0.0
        %1263 = vmatmul.mubr.f32.gmra.mxu0 %v1028
        %v1264 = vpop.f32.mrf.mxu0
        %v1265 = vadd.f32 %v1003, %v1264
        %v1266 = vpop.f32.mrf.mxu0
        %v1267 = vadd.f32 %v1003, %v1266
        %1268 = vdwg.mxu0
        %v1269 = vmax.f32 %v1110, 0.0
        %v1270 = vmax.f32 %v1112, 0.0
        %v1271 = vmax.f32 %v1223, 0.0
        %v1272 = vmax.f32 %v1225, 0.0
        %v1273 = vmax.f32 %v1116, 0.0
        %v1274 = vmax.f32 %v1118, 0.0
        %v1275 = vmax.f32 %v1229, 0.0
        %v1276 = vmax.f32 %v1231, 0.0
        %v1277 = vmax.f32 %v1122, 0.0
        %v1278 = vmax.f32 %v1124, 0.0
        %v1279 = vmax.f32 %v1235, 0.0
        %v1280 = vmax.f32 %v1237, 0.0
        %v1281 = vmax.f32 %v1128, 0.0
        %v1282 = vmax.f32 %v1130, 0.0
        %v1283 = vmax.f32 %v1241, 0.0
        %v1284 = vmax.f32 %v1243, 0.0
        %v1285 = vmax.f32 %v1134, 0.0
        %v1286 = vmax.f32 %v1136, 0.0
        %v1287 = vmax.f32 %v1247, 0.0
        %v1288 = vmax.f32 %v1249, 0.0
        %v1289 = vmax.f32 %v1140, 0.0
        %v1290 = vmax.f32 %v1142, 0.0
        %v1291 = vmax.f32 %v1253, 0.0
        %v1292 = vmax.f32 %v1255, 0.0
        %v1293 = vmax.f32 %v1146, 0.0
        %v1294 = vmax.f32 %v1148, 0.0
        %v1295 = vmax.f32 %v1259, 0.0
        %v1296 = vmax.f32 %v1261, 0.0
        %v1297 = vmax.f32 %v1152, 0.0
        %v1298 = vmax.f32 %v1154, 0.0
        %v1299 = vmax.f32 %v1265, 0.0
        %v1300 = vmax.f32 %v1267, 0.0
        %v1301 = vld [vmem:[%s4] sm:$0x3]
        %1303 = vset.pattern.permute.xlu0 3
        %1304 = vperm.xlu0 %1303, %v268
        %v1305 = vpop.permute.xlu0 %1304
        %vm1307 = vcmask 523264
        %v1309 = vsel %vm1307, %v1301, 0
        %1311 = vmatprep.subr.mxu0 0.0
        %1312 = vmatpush1.msra.mxu0 0.0
        %1313 = vmatprep.subr.mxu0 0.0
        %1314 = vmatpush1.msra.mxu0 0.0
        %1315 = vmatprep.subr.mxu0 0.0
        %1316 = vmatpush1.msra.mxu0 0.0
        %1317 = vmatprep.subr.mxu0 0.0
        %1318 = vmatpush1.msra.mxu0 0.0
        %1319 = vmatprep.subr.mxu0 0.0
        %1320 = vmatpush1.msra.mxu0 0.0
        %1321 = vmatprep.subr.mxu0 0.0
        %1322 = vmatpush1.msra.mxu0 0.0
        %1323 = vmatprep.subr.mxu0 0.0
        %1324 = vmatpush1.msra.mxu0 0.0
        %1325 = vmatprep.subr.mxu0 0.0
        %1326 = vmatpush1.msra.mxu0 0.0
        %1327 = vmatprep.subr.mxu0 %v1298
        %1328 = vmatpush1.msra.mxu0 %v1297
        %1329 = vmatprep.subr.mxu0 %v1294
        %1330 = vmatpush1.msra.mxu0 %v1293
        %1331 = vmatprep.subr.mxu0 %v1290
        %1332 = vmatpush1.msra.mxu0 %v1289
        %1333 = vmatprep.subr.mxu0 %v1286
        %1334 = vmatpush1.msra.mxu0 %v1285
        %1335 = vmatprep.subr.mxu0 %v1282
        %1336 = vmatpush1.msra.mxu0 %v1281
        %1337 = vmatprep.subr.mxu0 %v1278
        %1338 = vmatpush1.msra.mxu0 %v1277
        %1339 = vmatprep.subr.mxu0 %v1274
        %1340 = vmatpush1.msra.mxu0 %v1273
        %1341 = vmatprep.subr.mxu0 %v1270
        %1342 = vmatpush1.msra.mxu0 %v1269
        %1343 = vmatprep.subr.mxu0 0.0
        %1344 = vmatpush2.msra.mxu0 0.0
        %1345 = vmatprep.subr.mxu0 0.0
        %1346 = vmatpush2.msra.mxu0 0.0
        %1347 = vmatprep.subr.mxu0 0.0
        %1348 = vmatpush2.msra.mxu0 0.0
        %1349 = vmatprep.subr.mxu0 0.0
        %1350 = vmatpush2.msra.mxu0 0.0
        %1351 = vmatprep.subr.mxu0 0.0
        %1352 = vmatpush2.msra.mxu0 0.0
        %1353 = vmatprep.subr.mxu0 0.0
        %1354 = vmatpush2.msra.mxu0 0.0
        %1355 = vmatprep.subr.mxu0 0.0
        %1356 = vmatpush2.msra.mxu0 0.0
        %1357 = vmatprep.subr.mxu0 0.0
        %1358 = vmatpush2.msra.mxu0 0.0
        %1359 = vmatprep.subr.mxu0 0.0
        %1360 = vmatpush2.msra.mxu0 0.0
        %1361 = vmatprep.subr.mxu0 0.0
        %1362 = vmatpush2.msra.mxu0 0.0
        %1363 = vmatprep.subr.mxu0 0.0
        %1364 = vmatpush2.msra.mxu0 0.0
        %1365 = vmatprep.subr.mxu0 0.0
        %1366 = vmatpush2.msra.mxu0 0.0
        %1367 = vmatprep.subr.mxu0 0.0
        %1368 = vmatpush2.msra.mxu0 0.0
        %1369 = vmatprep.subr.mxu0 0.0
        %1370 = vmatpush2.msra.mxu0 0.0
        %1371 = vmatprep.subr.mxu0 0.0
        %1372 = vmatpush2.msra.mxu0 0.0
        %1373 = vmatprep.subr.mxu0 0.0
        %1374 = vmatpush2.msra.mxu0 0.0
        %1375 = vmatprep.mubr.f32.mxu0 0.0
        %1376 = vmatmul.mubr.f32.gmra.mxu0 %v1309
        %v1377 = vpop.f32.mrf.mxu0
        %v1378 = vadd.f32 %v1305, %v1377
        %v1379 = vpop.f32.mrf.mxu0
        %v1380 = vadd.f32 %v1305, %v1379
        %1381 = vdwg.mxu0
        %1382 = vmatprep.subr.mxu0 0.0
        %1383 = vmatpush1.msra.mxu0 0.0
        %1384 = vmatprep.subr.mxu0 0.0
        %1385 = vmatpush1.msra.mxu0 0.0
        %1386 = vmatprep.subr.mxu0 0.0
        %1387 = vmatpush1.msra.mxu0 0.0
        %1388 = vmatprep.subr.mxu0 0.0
        %1389 = vmatpush1.msra.mxu0 0.0
        %1390 = vmatprep.subr.mxu0 0.0
        %1391 = vmatpush1.msra.mxu0 0.0
        %1392 = vmatprep.subr.mxu0 0.0
        %1393 = vmatpush1.msra.mxu0 0.0
        %1394 = vmatprep.subr.mxu0 0.0
        %1395 = vmatpush1.msra.mxu0 0.0
        %1396 = vmatprep.subr.mxu0 0.0
        %1397 = vmatpush1.msra.mxu0 0.0
        %1398 = vmatprep.subr.mxu0 %v1300
        %1399 = vmatpush1.msra.mxu0 %v1299
        %1400 = vmatprep.subr.mxu0 %v1296
        %1401 = vmatpush1.msra.mxu0 %v1295
        %1402 = vmatprep.subr.mxu0 %v1292
        %1403 = vmatpush1.msra.mxu0 %v1291
        %1404 = vmatprep.subr.mxu0 %v1288
        %1405 = vmatpush1.msra.mxu0 %v1287
        %1406 = vmatprep.subr.mxu0 %v1284
        %1407 = vmatpush1.msra.mxu0 %v1283
        %1408 = vmatprep.subr.mxu0 %v1280
        %1409 = vmatpush1.msra.mxu0 %v1279
        %1410 = vmatprep.subr.mxu0 %v1276
        %1411 = vmatpush1.msra.mxu0 %v1275
        %1412 = vmatprep.subr.mxu0 %v1272
        %1413 = vmatpush1.msra.mxu0 %v1271
        %1414 = vmatprep.subr.mxu0 0.0
        %1415 = vmatpush2.msra.mxu0 0.0
        %1416 = vmatprep.subr.mxu0 0.0
        %1417 = vmatpush2.msra.mxu0 0.0
        %1418 = vmatprep.subr.mxu0 0.0
        %1419 = vmatpush2.msra.mxu0 0.0
        %1420 = vmatprep.subr.mxu0 0.0
        %1421 = vmatpush2.msra.mxu0 0.0
        %1422 = vmatprep.subr.mxu0 0.0
        %1423 = vmatpush2.msra.mxu0 0.0
        %1424 = vmatprep.subr.mxu0 0.0
        %1425 = vmatpush2.msra.mxu0 0.0
        %1426 = vmatprep.subr.mxu0 0.0
        %1427 = vmatpush2.msra.mxu0 0.0
        %1428 = vmatprep.subr.mxu0 0.0
        %1429 = vmatpush2.msra.mxu0 0.0
        %1430 = vmatprep.subr.mxu0 0.0
        %1431 = vmatpush2.msra.mxu0 0.0
        %1432 = vmatprep.subr.mxu0 0.0
        %1433 = vmatpush2.msra.mxu0 0.0
        %1434 = vmatprep.subr.mxu0 0.0
        %1435 = vmatpush2.msra.mxu0 0.0
        %1436 = vmatprep.subr.mxu0 0.0
        %1437 = vmatpush2.msra.mxu0 0.0
        %1438 = vmatprep.subr.mxu0 0.0
        %1439 = vmatpush2.msra.mxu0 0.0
        %1440 = vmatprep.subr.mxu0 0.0
        %1441 = vmatpush2.msra.mxu0 0.0
        %1442 = vmatprep.subr.mxu0 0.0
        %1443 = vmatpush2.msra.mxu0 0.0
        %1444 = vmatprep.subr.mxu0 0.0
        %1445 = vmatpush2.msra.mxu0 0.0
        %1446 = vmatprep.mubr.f32.mxu0 0.0
        %1447 = vmatmul.mubr.f32.gmra.mxu0 %v1309
        %v1448 = vpop.f32.mrf.mxu0
        %v1449 = vadd.f32 %v1305, %v1448
        %v1450 = vpop.f32.mrf.mxu0
        %v1451 = vadd.f32 %v1305, %v1450
        %1452 = vdwg.mxu0
        %v1457 = vcombine.low %v1378, %v1380
        %v1458 = vcombine.low %v1449, %v1451
        %v1460 = vunpack.c.l.s4 1983009808
        %v1461 = vunpack.c.0.s8 %v1460
        %v1462 = vlaneseq
        %v1463 = vshrl.u32 %v1462, 7
        %v1464 = vsub.s32 %v1461, %v1463
        %v1465 = vrot.slane %v1457, %v1464
        %v1467 = vunpack.c.l.s4 1983009808
        %v1468 = vunpack.c.0.s8 %v1467
        %v1469 = vlaneseq
        %v1470 = vshrl.u32 %v1469, 7
        %v1471 = vsub.s32 %v1468, %v1470
        %v1472 = vrot.slane %v1458, %v1471
        %v1473 = vcombine.low %v1465, %v1472
        %1475 = vst [vmem:[%s245] sm:$0xff] %v1473
        %s1476 = sand.u32 %s159, 1
        %s1477 = scalar_lea.sflag [#allocation3], %s1476
        %s1478 = sand.u32 %s159, 1
        %s1479 = smul.addr %s1478, 8
        %s1480 = scalar_lea.vmem [#allocation2], %s1479
        // Predicated region
        $region45: #{tpu_custom_call.1} parent=43 // pred_check
          %p1481 = pneg %p169
        $region46: #{tpu_custom_call.1} parent=43 // pred_check_branch
          %1483 = sbr.rel (%p1481) target = $region48
        $region47: #{tpu_custom_call.1} parent=43 // pred_region
          %s1484 = smul.u32 4, %s20
          %s1486 = ssub.s32 128, 128
          %1487 = vsyncadd %s1477, %s1486
          %s1488 = smul.addr %s1484, 32
          %s1489 = scalar_lea.hbm %s6, %s1488
          %s1491 = sshll.u32 %s1480, 4
          %s1492 = int_to_ptr.vmem [resolvable:$true] %s1491
          %1494 = dma.vmem_to_hbm [thread:$0]  %s1492, 128, %s1489, %s1477
        $region48: #{tpu_custom_call.1} parent=43 // pred_fallthru
          _
      $region44: #{tpu_custom_call.1} parent=5 // pred_fallthru
        _
      %p1495 = scmp.le.s32.totalorder 2, %s15
      // Predicated region
      $region49: #{tpu_custom_call.1} parent=5 // pred_check
        %p1496 = pneg %p1495
      $region50: #{tpu_custom_call.1} parent=5 // pred_check_branch
        %1498 = sbr.rel (%p1496) target = $region52
      $region51: #{tpu_custom_call.1} parent=5 // pred_region
        %s1499 = ssub.s32 %s15, 2
        // Predicated region
        $region53: #{tpu_custom_call.1} parent=51 // pred_check
          %p1500 = pneg %p175
        $region54: #{tpu_custom_call.1} parent=51 // pred_check_branch
          %1502 = sbr.rel (%p1500) target = $region56
        $region55: #{tpu_custom_call.1} parent=51 // pred_region
          %s1503 = sand.u32 %s160, 1
          %s1504 = scalar_lea.sflag [#allocation3], %s1503
          %s1505 = sand.u32 %s160, 1
          %s1506 = smul.addr %s1505, 8
          %s1507 = scalar_lea.vmem [#allocation2], %s1506
          %1508 = dma.done %s1504, 128
        $region56: #{tpu_custom_call.1} parent=51 // pred_fallthru
          _
      $region52: #{tpu_custom_call.1} parent=5 // pred_fallthru
        _
    $region6: #{tpu_custom_call.1} parent=1 // loop_footer
      %s19 = sadd.s32 1, %s15
    $region7: #{tpu_custom_call.1} parent=1 // loop_footer_branch
      %14 = sbr.rel target = $region3
    $region8: #{tpu_custom_call.1} parent=1 // loop_exit
      _
    %1509 = vsyncpa [#allocation3], 1
    %s1510 = scalar_lea.sflag [#allocation3], 1
    %1511 = vsyncpa %s1510, 1

</llo_original>
